<compile_context>
chip_gen: v7x
topology: tpu7x:2x2x1
jax: 0.10.0
libtpu: 0.0.40
codegen_flags: <defaults>
</compile_context>

<pallas_src>
from functools import partial

import numpy as np
import jax
import jax.numpy as jnp
from jax.experimental import pallas as pl
from jax.experimental.pallas import tpu as pltpu


# ---------------------------------------------------------------------------
# Kernel
# ---------------------------------------------------------------------------
def _stochastic_gnet_kernel(scale_ref, x_ref, eps_ref, *refs, n_layers):
    """One batch tile of the stochastic g-net forward.

    Argument order (set by in_specs / out_specs below):
      scale_ref : SMEM (1, 1) f32, holds 2.0 * output_scale
      x_ref     : VMEM (tb, d_in) f32
      eps_ref   : VMEM (tb, 1) f32   -- the randn_like noise
      refs      : (W_0..W_{L-1}, b_0..b_{L-1}, out_ref)
                  W_i: VMEM (d_i, d_{i+1}) bf16 (transposed vs PyTorch)
                  b_i: VMEM (1, d_{i+1}) f32
                  out_ref: VMEM (tb, 1) f32
    """
    w_refs = refs[:n_layers]
    b_refs = refs[n_layers:2 * n_layers]
    o_ref = refs[2 * n_layers]

    h = x_ref[...]                                    # f32 (tb, d_in)
    for i in range(n_layers):
        # bf16 operands, f32 accumulation on the MXU.
        h = jnp.dot(h.astype(jnp.bfloat16), w_refs[i][...],
                    preferred_element_type=jnp.float32) + b_refs[i][...]
        if i < n_layers - 1:                          # hidden layers: ReLU
            h = jnp.maximum(h, 0.0)

    # Final layer width is 2: column 0 = mu, column 1 = log(sigma).
    mu = h[:, 0:1]                                    # (tb, 1)
    sigma = jnp.exp(h[:, 1:2])                        # (tb, 1) -> EUP
    scale2 = scale_ref[0, 0]                          # 2.0 * output_scale
    o_ref[...] = ((mu + sigma * eps_ref[...]) * scale2).astype(o_ref.dtype)


# ---------------------------------------------------------------------------
# Wrapper
# ---------------------------------------------------------------------------
def _pick_batch_tile(B):
    """Largest tile in 128..2048 that divides B and leaves >= 2 grid steps."""
    for t in (2048, 1024, 512, 256, 128):
        if B % t == 0 and B // t >= 2:
            return t
    return B


def stochastic_gnet_forward(x, weights, biases, output_scale, eps,
                            *, batch_tile=None):
    """Pallas wrapper for StochasticGenomicBottleNet.forward.

    Args:
      x:        (B, sizes[0]) float32
      weights:  list of (sizes[i], sizes[i+1]) bf16  (transposed vs PyTorch)
      biases:   list of (1, sizes[i+1]) float32
      output_scale: scalar (python float or 0-d array; detached)
      eps:      (B,) float32 standard-normal noise (randn_like equivalent)

    Returns:
      (B,) float32
    """
    n_layers = len(weights)
    B, d_in = x.shape
    assert weights[-1].shape[1] == 2, "final layer must output (mu, logsigma)"
    tb = _pick_batch_tile(B) if batch_tile is None else batch_tile
    # TODO(synk): ragged batches need a masked tail tile.
    assert B % tb == 0

    eps2 = eps.reshape(B, 1).astype(jnp.float32)
    scale2 = (jnp.asarray(output_scale, jnp.float32) *
              jnp.float32(2.0)).reshape(1, 1)

    kernel = partial(_stochastic_gnet_kernel, n_layers=n_layers)

    in_specs = [
        pl.BlockSpec(memory_space=pltpu.MemorySpace.SMEM),     # scale2 scalar
        pl.BlockSpec((tb, d_in), lambda i: (i, 0)),            # x batch tile
        pl.BlockSpec((tb, 1), lambda i: (i, 0)),               # eps batch tile
    ]
    # Full, grid-invariant weight / bias blocks (fetched once, resident).
    for w in weights:
        in_specs.append(pl.BlockSpec(w.shape, lambda i: (0, 0)))
    for b in biases:
        in_specs.append(pl.BlockSpec(b.shape, lambda i: (0, 0)))

    out = pl.pallas_call(
        kernel,
        out_shape=jax.ShapeDtypeStruct((B, 1), jnp.float32),
        grid_spec=pltpu.PrefetchScalarGridSpec(
            num_scalar_prefetch=0,
            grid=(B // tb,),
            in_specs=in_specs,
            out_specs=pl.BlockSpec((tb, 1), lambda i: (i, 0)),
        ),
        compiler_params=pltpu.CompilerParams(
            dimension_semantics=("parallel",)),     # batch-parallel (v7x 2 TC)
    )(scale2, x, eps2, *weights, *biases)
    return out.reshape(B)


# ---------------------------------------------------------------------------
# Parameter init (matches StochasticGenomicBottleNet.__init__ / init_weights)
# ---------------------------------------------------------------------------
def init_stochastic_gnet_params(key, sizes):
    """weights ~ Normal(0, 0.01) (PyTorch (out,in), stored transposed, bf16),
    biases zero, final bias set to [0.01, log(0.02)]."""
    assert sizes[-1] == 2
    weights, biases = [], []
    for i in range(len(sizes) - 1):
        key, sub = jax.random.split(key)
        w_pt = 0.01 * jax.random.normal(sub, (sizes[i + 1], sizes[i]),
                                        jnp.float32)     # PyTorch (out, in)
        weights.append(jnp.asarray(w_pt.T, dtype=jnp.bfloat16))
        biases.append(jnp.zeros((1, sizes[i + 1]), jnp.float32))
    biases[-1] = jnp.array([[0.01, np.log(0.02)]], dtype=jnp.float32)
    return weights, biases


# ---------------------------------------------------------------------------
# Pure-JAX reference (same bf16-weight / f32-accumulate numerics)
# ---------------------------------------------------------------------------
def stochastic_gnet_reference(x, weights, biases, output_scale, eps):
    h = x
    n = len(weights)
    for i in range(n):
        h = jnp.dot(h.astype(jnp.bfloat16), weights[i],
                    preferred_element_type=jnp.float32) + biases[i]
        if i < n - 1:
            h = jnp.maximum(h, 0.0)
    mu, logsigma = h[:, 0], h[:, 1]
    return (mu + jnp.exp(logsigma) * eps) * 2.0 * jnp.asarray(output_scale,
                                                              jnp.float32)


if __name__ == "__main__":
    # Small shapes consistent with the module: a g-net MLP whose last layer
    # predicts (mu, logsigma). Batch large enough for a >1 grid.
    sizes = (32, 64, 64, 2)
    batch = 512
    output_scale = jnp.float32(0.5)          # stands in for the detached scalar

    key = jax.random.PRNGKey(0)
    key, xkey, ekey = jax.random.split(key, 3)
    x = jax.random.normal(xkey, (batch, sizes[0]), jnp.float32)
    # JAX analogue of torch.randn_like(logsigma).detach(): explicit noise input.
    eps = jax.random.normal(ekey, (batch,), jnp.float32)

    weights, biases = init_stochastic_gnet_params(key, sizes)

    out = stochastic_gnet_forward(x, weights, biases, output_scale, eps)
    out = jax.block_until_ready(out)

    ref = stochastic_gnet_reference(x, weights, biases, output_scale, eps)
    assert out.shape == (batch,)
    assert jnp.allclose(out, ref, atol=1e-5, rtol=1e-4), "mismatch vs reference"

    print("KERNEL_OK")
</pallas_src>

<mosaic_0001>
module attributes {stable_mosaic.version = 11 : i64} {
  func.func @_stochastic_gnet_kernel(%arg0: i32, %arg1: memref<1x1xf32, #tpu.memory_space<smem>>, %arg2: memref<256x32xf32, #tpu.memory_space<vmem>>, %arg3: memref<256x1xf32, #tpu.memory_space<vmem>>, %arg4: memref<32x64xbf16, #tpu.memory_space<vmem>>, %arg5: memref<64x64xbf16, #tpu.memory_space<vmem>>, %arg6: memref<64x2xbf16, #tpu.memory_space<vmem>>, %arg7: memref<1x64xf32, #tpu.memory_space<vmem>>, %arg8: memref<1x64xf32, #tpu.memory_space<vmem>>, %arg9: memref<1x2xf32, #tpu.memory_space<vmem>>, %arg10: memref<256x1xf32, #tpu.memory_space<vmem>>) attributes {dimension_semantics = [#tpu.dimension_semantics<parallel>], iteration_bounds = array<i64: 2>, scalar_prefetch = 0 : i64, scratch_operands = 0 : i64, tpu.core_type = #tpu.core_type<tc>, window_params = [{transform_indices = @transform_0, window_bounds = array<i64: 1, 1>}, {transform_indices = @transform_1, window_bounds = array<i64: 256, 32>}, {transform_indices = @transform_2, window_bounds = array<i64: 256, 1>}, {pipeline_mode = #tpu.pipeline_mode<synchronous>, transform_indices = @transform_3, window_bounds = array<i64: 32, 64>}, {pipeline_mode = #tpu.pipeline_mode<synchronous>, transform_indices = @transform_4, window_bounds = array<i64: 64, 64>}, {pipeline_mode = #tpu.pipeline_mode<synchronous>, transform_indices = @transform_5, window_bounds = array<i64: 64, 2>}, {pipeline_mode = #tpu.pipeline_mode<synchronous>, transform_indices = @transform_6, window_bounds = array<i64: 1, 64>}, {pipeline_mode = #tpu.pipeline_mode<synchronous>, transform_indices = @transform_7, window_bounds = array<i64: 1, 64>}, {pipeline_mode = #tpu.pipeline_mode<synchronous>, transform_indices = @transform_8, window_bounds = array<i64: 1, 2>}, {transform_indices = @transform_9, window_bounds = array<i64: 256, 1>}]} {
    %c0 = arith.constant 0 : index
    %c0_0 = arith.constant 0 : index
    %0 = vector.load %arg2[%c0, %c0_0] : memref<256x32xf32, #tpu.memory_space<vmem>>, vector<256x32xf32>
    %1 = arith.truncf %0 : vector<256x32xf32> to vector<256x32xbf16>
    %c0_1 = arith.constant 0 : index
    %c0_2 = arith.constant 0 : index
    %2 = vector.load %arg4[%c0_1, %c0_2] : memref<32x64xbf16, #tpu.memory_space<vmem>>, vector<32x64xbf16>
    %cst = arith.constant dense<0.000000e+00> : vector<256x64xf32>
    %3 = tpu.matmul %1, %2, %cst {dimension_numbers = #tpu.dot_dimension_numbers<[1], [0], [0], [1], [0, 0, 1, 1], [], []>} : vector<256x32xbf16>, vector<32x64xbf16>, vector<256x64xf32> -> vector<256x64xf32>
    %c0_3 = arith.constant 0 : index
    %c0_4 = arith.constant 0 : index
    %4 = vector.load %arg7[%c0_3, %c0_4] : memref<1x64xf32, #tpu.memory_space<vmem>>, vector<1x64xf32>
    %5 = vector.broadcast %4 : vector<1x64xf32> to vector<256x64xf32>
    %6 = arith.addf %3, %5 : vector<256x64xf32>
    %cst_5 = arith.constant 0.000000e+00 : f32
    %7 = vector.broadcast %cst_5 : f32 to vector<256x64xf32>
    %8 = arith.maximumf %6, %7 : vector<256x64xf32>
    %9 = arith.truncf %8 : vector<256x64xf32> to vector<256x64xbf16>
    %c0_6 = arith.constant 0 : index
    %c0_7 = arith.constant 0 : index
    %10 = vector.load %arg5[%c0_6, %c0_7] : memref<64x64xbf16, #tpu.memory_space<vmem>>, vector<64x64xbf16>
    %cst_8 = arith.constant dense<0.000000e+00> : vector<256x64xf32>
    %11 = tpu.matmul %9, %10, %cst_8 {dimension_numbers = #tpu.dot_dimension_numbers<[1], [0], [0], [1], [0, 0, 1, 1], [], []>} : vector<256x64xbf16>, vector<64x64xbf16>, vector<256x64xf32> -> vector<256x64xf32>
    %c0_9 = arith.constant 0 : index
    %c0_10 = arith.constant 0 : index
    %12 = vector.load %arg8[%c0_9, %c0_10] : memref<1x64xf32, #tpu.memory_space<vmem>>, vector<1x64xf32>
    %13 = vector.broadcast %12 : vector<1x64xf32> to vector<256x64xf32>
    %14 = arith.addf %11, %13 : vector<256x64xf32>
    %cst_11 = arith.constant 0.000000e+00 : f32
    %15 = vector.broadcast %cst_11 : f32 to vector<256x64xf32>
    %16 = arith.maximumf %14, %15 : vector<256x64xf32>
    %17 = arith.truncf %16 : vector<256x64xf32> to vector<256x64xbf16>
    %c0_12 = arith.constant 0 : index
    %c0_13 = arith.constant 0 : index
    %18 = vector.load %arg6[%c0_12, %c0_13] : memref<64x2xbf16, #tpu.memory_space<vmem>>, vector<64x2xbf16>
    %cst_14 = arith.constant dense<0.000000e+00> : vector<256x2xf32>
    %19 = tpu.matmul %17, %18, %cst_14 {dimension_numbers = #tpu.dot_dimension_numbers<[1], [0], [0], [1], [0, 0, 1, 1], [], []>} : vector<256x64xbf16>, vector<64x2xbf16>, vector<256x2xf32> -> vector<256x2xf32>
    %c0_15 = arith.constant 0 : index
    %c0_16 = arith.constant 0 : index
    %20 = vector.load %arg9[%c0_15, %c0_16] : memref<1x2xf32, #tpu.memory_space<vmem>>, vector<1x2xf32>
    %21 = vector.broadcast %20 : vector<1x2xf32> to vector<256x2xf32>
    %22 = arith.addf %19, %21 : vector<256x2xf32>
    %23 = vector.extract_strided_slice %22 {offsets = [0, 0], sizes = [256, 1], strides = [1, 1]} : vector<256x2xf32> to vector<256x1xf32>
    %24 = vector.extract_strided_slice %22 {offsets = [0, 1], sizes = [256, 1], strides = [1, 1]} : vector<256x2xf32> to vector<256x1xf32>
    %25 = math.exp %24 : vector<256x1xf32>
    %c0_17 = arith.constant 0 : index
    %c0_18 = arith.constant 0 : index
    %26 = memref.load %arg1[%c0_17, %c0_18] : memref<1x1xf32, #tpu.memory_space<smem>>
    %c0_19 = arith.constant 0 : index
    %c0_20 = arith.constant 0 : index
    %27 = vector.load %arg3[%c0_19, %c0_20] : memref<256x1xf32, #tpu.memory_space<vmem>>, vector<256x1xf32>
    %28 = arith.mulf %25, %27 : vector<256x1xf32>
    %29 = arith.addf %23, %28 : vector<256x1xf32>
    %30 = vector.broadcast %26 : f32 to vector<256x1xf32>
    %31 = arith.mulf %29, %30 : vector<256x1xf32>
    %c0_21 = arith.constant 0 : index
    %c0_22 = arith.constant 0 : index
    %32 = vector.load %arg10[%c0_21, %c0_22] : memref<256x1xf32, #tpu.memory_space<vmem>>, vector<256x1xf32>
    tpu.vector_store %arg10[%c0_21, %c0_22], %31 {strides = array<i32>} : memref<256x1xf32, #tpu.memory_space<vmem>>, vector<256x1xf32>,
    return
  }
  func.func @transform_0(%arg0: i32) -> (i32, i32) {
    %c0_i32 = arith.constant 0 : i32
    %c0_i32_0 = arith.constant 0 : i32
    %c0_i32_1 = arith.constant 0 : i32
    return %c0_i32, %c0_i32_0 : i32, i32
  }
  func.func @transform_1(%arg0: i32) -> (i32, i32) {
    %c0_i32 = arith.constant 0 : i32
    %c0_i32_0 = arith.constant 0 : i32
    return %arg0, %c0_i32 : i32, i32
  }
  func.func @transform_2(%arg0: i32) -> (i32, i32) {
    %c0_i32 = arith.constant 0 : i32
    %c0_i32_0 = arith.constant 0 : i32
    return %arg0, %c0_i32 : i32, i32
  }
  func.func @transform_3(%arg0: i32) -> (i32, i32) {
    %c0_i32 = arith.constant 0 : i32
    %c0_i32_0 = arith.constant 0 : i32
    %c0_i32_1 = arith.constant 0 : i32
    return %c0_i32, %c0_i32_0 : i32, i32
  }
  func.func @transform_4(%arg0: i32) -> (i32, i32) {
    %c0_i32 = arith.constant 0 : i32
    %c0_i32_0 = arith.constant 0 : i32
    %c0_i32_1 = arith.constant 0 : i32
    return %c0_i32, %c0_i32_0 : i32, i32
  }
  func.func @transform_5(%arg0: i32) -> (i32, i32) {
    %c0_i32 = arith.constant 0 : i32
    %c0_i32_0 = arith.constant 0 : i32
    %c0_i32_1 = arith.constant 0 : i32
    return %c0_i32, %c0_i32_0 : i32, i32
  }
  func.func @transform_6(%arg0: i32) -> (i32, i32) {
    %c0_i32 = arith.constant 0 : i32
    %c0_i32_0 = arith.constant 0 : i32
    %c0_i32_1 = arith.constant 0 : i32
    return %c0_i32, %c0_i32_0 : i32, i32
  }
  func.func @transform_7(%arg0: i32) -> (i32, i32) {
    %c0_i32 = arith.constant 0 : i32
    %c0_i32_0 = arith.constant 0 : i32
    %c0_i32_1 = arith.constant 0 : i32
    return %c0_i32, %c0_i32_0 : i32, i32
  }
  func.func @transform_8(%arg0: i32) -> (i32, i32) {
    %c0_i32 = arith.constant 0 : i32
    %c0_i32_0 = arith.constant 0 : i32
    %c0_i32_1 = arith.constant 0 : i32
    return %c0_i32, %c0_i32_0 : i32, i32
  }
  func.func @transform_9(%arg0: i32) -> (i32, i32) {
    %c0_i32 = arith.constant 0 : i32
    %c0_i32_0 = arith.constant 0 : i32
    return %arg0, %c0_i32 : i32, i32
  }
}

</mosaic_0001>

<llo_original>
// kernel: tpu_custom_call.1
$region0: #{tpu_custom_call.1}
  #allocation0 [shape = 'u32[]', space=smem, size = 0x4, offset = 0x4, fixed_abs, tag = 'smem constant byte address 0x4 - core index']
  #allocation1 [shape = 'u32[144,128]{1,0:T(1,128)}', space=vmem, size = 0x12000, scoped, tag = 'internal scratch']
  #allocation2 [shape = 'f32[1,1]{1,0:T(1,128)S(6)}', space=smem, size = 0x200, scoped, tag = 'scoped memory for tpu_custom_call.1']
  %s0 = inlined_call_operand.<no memory space> [shape: f32[1,1], index: 0, kind: input, shape index: {}]
  %s1 = inlined_call_operand.vmem [shape: f32[512,32], index: 1, kind: input, shape index: {}]
  %s2 = inlined_call_operand.vmem [shape: f32[512,1], index: 2, kind: input, shape index: {}]
  %s3 = inlined_call_operand.vmem [shape: bf16[32,64], index: 3, kind: input, shape index: {}]
  %s4 = inlined_call_operand.vmem [shape: bf16[64,64], index: 4, kind: input, shape index: {}]
  %s5 = inlined_call_operand.vmem [shape: bf16[64,2], index: 5, kind: input, shape index: {}]
  %s6 = inlined_call_operand.vmem [shape: f32[1,64], index: 6, kind: input, shape index: {}]
  %s7 = inlined_call_operand.vmem [shape: f32[1,64], index: 7, kind: input, shape index: {}]
  %s8 = inlined_call_operand.vmem [shape: f32[1,2], index: 8, kind: input, shape index: {}]
  %s9 = inlined_call_operand.vmem [shape: f32[512,1], index: 9, kind: output, shape index: {}]
  %s10 = sld [smem:[#allocation0]]
  $region69: #{tpu_custom_call.1} parent=0
    _
  %s12 = ssub.s32 1, %s10
  %s13 = scalar_select 0, %s12, %s10
  %14 = sst [smem:[#allocation2]] %s0
  loop: start=0, step=1, limit=4
  $region2: #{tpu_custom_call.1} parent=0 // loop_pre_header
    _
  $region3: #{tpu_custom_call.1} parent=0 // loop_header
    %s16 = sphi 0, %s20
    %p17 = scmp.ge.s32.totalorder %s16, 4
    %s24 = sphi 0, %s24
    %s26 = sphi 0, %s24
    %s27 = sphi 0, %s26
    %s41 = sphi 0, %s27
    %s47 = sphi 0, %s49
    %s50 = sphi 0, %s47
    %s51 = sphi 0, %s50
    %s67 = sphi 0, %s51
    %s73 = sphi 0, %s75
    %s76 = sphi 0, %s73
    %s77 = sphi 0, %s76
    %s93 = sphi 0, %s77
    %s97 = sphi 0, %s97
    %s99 = sphi 0, %s97
    %s100 = sphi 0, %s99
    %s114 = sphi 0, %s100
    %s118 = sphi 0, %s118
    %s120 = sphi 0, %s118
    %s121 = sphi 0, %s120
    %s135 = sphi 0, %s121
    %s139 = sphi 0, %s139
    %s141 = sphi 0, %s139
    %s142 = sphi 0, %s141
    %s156 = sphi 0, %s142
    %s160 = sphi 0, %s160
    %s162 = sphi 0, %s160
    %s163 = sphi 0, %s162
    %s177 = sphi 0, %s163
    %s181 = sphi 0, %s181
    %s183 = sphi 0, %s181
    %s184 = sphi 0, %s183
    %s198 = sphi 0, %s184
    %s202 = sphi 0, %s202
    %s204 = sphi 0, %s202
    %s205 = sphi 0, %s204
    %s219 = sphi 0, %s205
    %s225 = sphi 0, %s227
    %s228 = sphi 0, %s225
    %s229 = sphi 0, %s228
    %s245 = sphi 0, %s229
  $region4: #{tpu_custom_call.1} parent=0 // loop_header_branch
    %19 = sbr.rel (%p17) target = $region8
  $region5: #{tpu_custom_call.1} parent=0 // loop_body
    %s21 = ssub.s32 %s16, 1
    %s22 = ssub.s32 %s16, 2
    %s23 = sadd.s32 %s16, 1
    %s25 = sadd.s32 %s24, 1
    %p28 = scmp.eq.s32.totalorder %s16, 1
    %p29 = scmp.ne.s32.totalorder %s24, %s26
    %p30 = scmp.eq.s32.totalorder %s16, 0
    %p31 = por %p29, %p30
    %p32 = scmp.ne.s32.totalorder %s24, %s26
    %p33 = scmp.eq.s32.totalorder %s21, 1
    %p34 = por %p32, %p33
    %p35 = scmp.ne.s32.totalorder %s26, %s27
    %p36 = scmp.eq.s32.totalorder %s21, 0
    %p37 = por %p35, %p36
    %p38 = scmp.ne.s32.totalorder %s26, %s27
    %p39 = scmp.eq.s32.totalorder %s22, 1
    %p40 = por %p38, %p39
    %p42 = scmp.ne.s32.totalorder %s27, %s41
    %p43 = scmp.eq.s32.totalorder %s22, 0
    %p44 = por %p42, %p43
    %s45 = ssub.s32 %s16, %s23
    %p46 = scmp.eq.s32.totalorder %s45, 0
    %s48 = sadd.s32 %s47, 1
    %s49 = scalar_select %p46, %s47, %s48
    %p52 = pneg %p46
    %p53 = scmp.eq.s32.totalorder %s16, 1
    %p54 = por %p52, %p53
    %p55 = scmp.ne.s32.totalorder %s47, %s50
    %p56 = scmp.eq.s32.totalorder %s16, 0
    %p57 = por %p55, %p56
    %p58 = scmp.ne.s32.totalorder %s47, %s50
    %p59 = scmp.eq.s32.totalorder %s21, 1
    %p60 = por %p58, %p59
    %p61 = scmp.ne.s32.totalorder %s50, %s51
    %p62 = scmp.eq.s32.totalorder %s21, 0
    %p63 = por %p61, %p62
    %p64 = scmp.ne.s32.totalorder %s50, %s51
    %p65 = scmp.eq.s32.totalorder %s22, 1
    %p66 = por %p64, %p65
    %p68 = scmp.ne.s32.totalorder %s51, %s67
    %p69 = scmp.eq.s32.totalorder %s22, 0
    %p70 = por %p68, %p69
    %s71 = ssub.s32 %s16, %s23
    %p72 = scmp.eq.s32.totalorder %s71, 0
    %s74 = sadd.s32 %s73, 1
    %s75 = scalar_select %p72, %s73, %s74
    %p78 = pneg %p72
    %p79 = scmp.eq.s32.totalorder %s16, 1
    %p80 = por %p78, %p79
    %p81 = scmp.ne.s32.totalorder %s73, %s76
    %p82 = scmp.eq.s32.totalorder %s16, 0
    %p83 = por %p81, %p82
    %p84 = scmp.ne.s32.totalorder %s73, %s76
    %p85 = scmp.eq.s32.totalorder %s21, 1
    %p86 = por %p84, %p85
    %p87 = scmp.ne.s32.totalorder %s76, %s77
    %p88 = scmp.eq.s32.totalorder %s21, 0
    %p89 = por %p87, %p88
    %p90 = scmp.ne.s32.totalorder %s76, %s77
    %p91 = scmp.eq.s32.totalorder %s22, 1
    %p92 = por %p90, %p91
    %p94 = scmp.ne.s32.totalorder %s77, %s93
    %p95 = scmp.eq.s32.totalorder %s22, 0
    %p96 = por %p94, %p95
    %s98 = sadd.s32 %s97, 1
    %p101 = scmp.eq.s32.totalorder %s16, 1
    %p102 = scmp.ne.s32.totalorder %s97, %s99
    %p103 = scmp.eq.s32.totalorder %s16, 0
    %p104 = por %p102, %p103
    %p105 = scmp.ne.s32.totalorder %s97, %s99
    %p106 = scmp.eq.s32.totalorder %s21, 1
    %p107 = por %p105, %p106
    %p108 = scmp.ne.s32.totalorder %s99, %s100
    %p109 = scmp.eq.s32.totalorder %s21, 0
    %p110 = por %p108, %p109
    %p111 = scmp.ne.s32.totalorder %s99, %s100
    %p112 = scmp.eq.s32.totalorder %s22, 1
    %p113 = por %p111, %p112
    %p115 = scmp.ne.s32.totalorder %s100, %s114
    %p116 = scmp.eq.s32.totalorder %s22, 0
    %p117 = por %p115, %p116
    %s119 = sadd.s32 %s118, 1
    %p122 = scmp.eq.s32.totalorder %s16, 1
    %p123 = scmp.ne.s32.totalorder %s118, %s120
    %p124 = scmp.eq.s32.totalorder %s16, 0
    %p125 = por %p123, %p124
    %p126 = scmp.ne.s32.totalorder %s118, %s120
    %p127 = scmp.eq.s32.totalorder %s21, 1
    %p128 = por %p126, %p127
    %p129 = scmp.ne.s32.totalorder %s120, %s121
    %p130 = scmp.eq.s32.totalorder %s21, 0
    %p131 = por %p129, %p130
    %p132 = scmp.ne.s32.totalorder %s120, %s121
    %p133 = scmp.eq.s32.totalorder %s22, 1
    %p134 = por %p132, %p133
    %p136 = scmp.ne.s32.totalorder %s121, %s135
    %p137 = scmp.eq.s32.totalorder %s22, 0
    %p138 = por %p136, %p137
    %s140 = sadd.s32 %s139, 1
    %p143 = scmp.eq.s32.totalorder %s16, 1
    %p144 = scmp.ne.s32.totalorder %s139, %s141
    %p145 = scmp.eq.s32.totalorder %s16, 0
    %p146 = por %p144, %p145
    %p147 = scmp.ne.s32.totalorder %s139, %s141
    %p148 = scmp.eq.s32.totalorder %s21, 1
    %p149 = por %p147, %p148
    %p150 = scmp.ne.s32.totalorder %s141, %s142
    %p151 = scmp.eq.s32.totalorder %s21, 0
    %p152 = por %p150, %p151
    %p153 = scmp.ne.s32.totalorder %s141, %s142
    %p154 = scmp.eq.s32.totalorder %s22, 1
    %p155 = por %p153, %p154
    %p157 = scmp.ne.s32.totalorder %s142, %s156
    %p158 = scmp.eq.s32.totalorder %s22, 0
    %p159 = por %p157, %p158
    %s161 = sadd.s32 %s160, 1
    %p164 = scmp.eq.s32.totalorder %s16, 1
    %p165 = scmp.ne.s32.totalorder %s160, %s162
    %p166 = scmp.eq.s32.totalorder %s16, 0
    %p167 = por %p165, %p166
    %p168 = scmp.ne.s32.totalorder %s160, %s162
    %p169 = scmp.eq.s32.totalorder %s21, 1
    %p170 = por %p168, %p169
    %p171 = scmp.ne.s32.totalorder %s162, %s163
    %p172 = scmp.eq.s32.totalorder %s21, 0
    %p173 = por %p171, %p172
    %p174 = scmp.ne.s32.totalorder %s162, %s163
    %p175 = scmp.eq.s32.totalorder %s22, 1
    %p176 = por %p174, %p175
    %p178 = scmp.ne.s32.totalorder %s163, %s177
    %p179 = scmp.eq.s32.totalorder %s22, 0
    %p180 = por %p178, %p179
    %s182 = sadd.s32 %s181, 1
    %p185 = scmp.eq.s32.totalorder %s16, 1
    %p186 = scmp.ne.s32.totalorder %s181, %s183
    %p187 = scmp.eq.s32.totalorder %s16, 0
    %p188 = por %p186, %p187
    %p189 = scmp.ne.s32.totalorder %s181, %s183
    %p190 = scmp.eq.s32.totalorder %s21, 1
    %p191 = por %p189, %p190
    %p192 = scmp.ne.s32.totalorder %s183, %s184
    %p193 = scmp.eq.s32.totalorder %s21, 0
    %p194 = por %p192, %p193
    %p195 = scmp.ne.s32.totalorder %s183, %s184
    %p196 = scmp.eq.s32.totalorder %s22, 1
    %p197 = por %p195, %p196
    %p199 = scmp.ne.s32.totalorder %s184, %s198
    %p200 = scmp.eq.s32.totalorder %s22, 0
    %p201 = por %p199, %p200
    %s203 = sadd.s32 %s202, 1
    %p206 = scmp.eq.s32.totalorder %s16, 1
    %p207 = scmp.ne.s32.totalorder %s202, %s204
    %p208 = scmp.eq.s32.totalorder %s16, 0
    %p209 = por %p207, %p208
    %p210 = scmp.ne.s32.totalorder %s202, %s204
    %p211 = scmp.eq.s32.totalorder %s21, 1
    %p212 = por %p210, %p211
    %p213 = scmp.ne.s32.totalorder %s204, %s205
    %p214 = scmp.eq.s32.totalorder %s21, 0
    %p215 = por %p213, %p214
    %p216 = scmp.ne.s32.totalorder %s204, %s205
    %p217 = scmp.eq.s32.totalorder %s22, 1
    %p218 = por %p216, %p217
    %p220 = scmp.ne.s32.totalorder %s205, %s219
    %p221 = scmp.eq.s32.totalorder %s22, 0
    %p222 = por %p220, %p221
    %s223 = ssub.s32 %s16, %s23
    %p224 = scmp.eq.s32.totalorder %s223, 0
    %s226 = sadd.s32 %s225, 1
    %s227 = scalar_select %p224, %s225, %s226
    %p230 = pneg %p224
    %p231 = scmp.eq.s32.totalorder %s16, 1
    %p232 = por %p230, %p231
    %p233 = scmp.ne.s32.totalorder %s225, %s228
    %p234 = scmp.eq.s32.totalorder %s16, 0
    %p235 = por %p233, %p234
    %p236 = scmp.ne.s32.totalorder %s225, %s228
    %p237 = scmp.eq.s32.totalorder %s21, 1
    %p238 = por %p236, %p237
    %p239 = scmp.ne.s32.totalorder %s228, %s229
    %p240 = scmp.eq.s32.totalorder %s21, 0
    %p241 = por %p239, %p240
    %p242 = scmp.ne.s32.totalorder %s228, %s229
    %p243 = scmp.eq.s32.totalorder %s22, 1
    %p244 = por %p242, %p243
    %p246 = scmp.ne.s32.totalorder %s229, %s245
    %p247 = scmp.eq.s32.totalorder %s22, 0
    %p248 = por %p246, %p247
    %p249 = scmp.le.s32.totalorder 1, %s16
    %p250 = scmp.lt.s32.totalorder %s16, 3
    %p251 = pnand %p249, %p250
    %p252 = pneg %p251
    // Predicated region
    $region9: #{tpu_custom_call.1} parent=5 // pred_check
      _
    $region10: #{tpu_custom_call.1} parent=5 // pred_check_branch
      %254 = sbr.rel (%p251) target = $region12
    $region11: #{tpu_custom_call.1} parent=5 // pred_region
      %s255 = ssub.s32 %s16, 1
      // Predicated region
      $region13: #{tpu_custom_call.1} parent=11 // pred_check
        %p256 = pneg %p37
      $region14: #{tpu_custom_call.1} parent=11 // pred_check_branch
        %258 = sbr.rel (%p256) target = $region16
      $region15: #{tpu_custom_call.1} parent=11 // pred_region
        _
      $region16: #{tpu_custom_call.1} parent=11 // pred_fallthru
        _
      // Predicated region
      $region17: #{tpu_custom_call.1} parent=11 // pred_check
        %p259 = pneg %p110
      $region18: #{tpu_custom_call.1} parent=11 // pred_check_branch
        %261 = sbr.rel (%p259) target = $region20
      $region19: #{tpu_custom_call.1} parent=11 // pred_region
        _
      $region20: #{tpu_custom_call.1} parent=11 // pred_fallthru
        _
      // Predicated region
      $region21: #{tpu_custom_call.1} parent=11 // pred_check
        %p262 = pneg %p131
      $region22: #{tpu_custom_call.1} parent=11 // pred_check_branch
        %264 = sbr.rel (%p262) target = $region24
      $region23: #{tpu_custom_call.1} parent=11 // pred_region
        _
      $region24: #{tpu_custom_call.1} parent=11 // pred_fallthru
        _
      // Predicated region
      $region25: #{tpu_custom_call.1} parent=11 // pred_check
        %p265 = pneg %p152
      $region26: #{tpu_custom_call.1} parent=11 // pred_check_branch
        %267 = sbr.rel (%p265) target = $region28
      $region27: #{tpu_custom_call.1} parent=11 // pred_region
        _
      $region28: #{tpu_custom_call.1} parent=11 // pred_fallthru
        _
      // Predicated region
      $region29: #{tpu_custom_call.1} parent=11 // pred_check
        %p268 = pneg %p173
      $region30: #{tpu_custom_call.1} parent=11 // pred_check_branch
        %270 = sbr.rel (%p268) target = $region32
      $region31: #{tpu_custom_call.1} parent=11 // pred_region
        _
      $region32: #{tpu_custom_call.1} parent=11 // pred_fallthru
        _
      // Predicated region
      $region33: #{tpu_custom_call.1} parent=11 // pred_check
        %p271 = pneg %p194
      $region34: #{tpu_custom_call.1} parent=11 // pred_check_branch
        %273 = sbr.rel (%p271) target = $region36
      $region35: #{tpu_custom_call.1} parent=11 // pred_region
        _
      $region36: #{tpu_custom_call.1} parent=11 // pred_fallthru
        _
      // Predicated region
      $region37: #{tpu_custom_call.1} parent=11 // pred_check
        %p274 = pneg %p215
      $region38: #{tpu_custom_call.1} parent=11 // pred_check_branch
        %276 = sbr.rel (%p274) target = $region40
      $region39: #{tpu_custom_call.1} parent=11 // pred_region
        _
      $region40: #{tpu_custom_call.1} parent=11 // pred_fallthru
        _
    $region12: #{tpu_custom_call.1} parent=5 // pred_fallthru
      _
    %p277 = scmp.lt.s32.totalorder %s16, 2
    // Predicated region
    $region41: #{tpu_custom_call.1} parent=5 // pred_check
      %p278 = pneg %p277
    $region42: #{tpu_custom_call.1} parent=5 // pred_check_branch
      %280 = sbr.rel (%p278) target = $region44
    $region43: #{tpu_custom_call.1} parent=5 // pred_region
      // Predicated region
      $region45: #{tpu_custom_call.1} parent=43 // pred_check
        %p281 = pneg %p57
      $region46: #{tpu_custom_call.1} parent=43 // pred_check_branch
        %283 = sbr.rel (%p281) target = $region48
      $region47: #{tpu_custom_call.1} parent=43 // pred_region
        %s284 = smul.u32 32, %s16
        %p285 = scmp.lt.s32.totalorder %s284, 63
        %s286 = scalar_select %p285, %s284, 63
        %s287 = smul.addr %s286, 8
        %s288 = scalar_lea.vmem %s1, %s287
        %s289 = smul.u32 32, %s16
      $region48: #{tpu_custom_call.1} parent=43 // pred_fallthru
        _
      // Predicated region
      $region49: #{tpu_custom_call.1} parent=43 // pred_check
        %p290 = pneg %p83
      $region50: #{tpu_custom_call.1} parent=43 // pred_check_branch
        %292 = sbr.rel (%p290) target = $region52
      $region51: #{tpu_custom_call.1} parent=43 // pred_region
        %s293 = smul.u32 32, %s16
        %p294 = scmp.lt.s32.totalorder %s293, 63
        %s295 = scalar_select %p294, %s293, 63
        %s296 = smul.addr %s295, 8
        %s297 = scalar_lea.vmem %s2, %s296
        %s298 = smul.u32 32, %s16
      $region52: #{tpu_custom_call.1} parent=43 // pred_fallthru
        _
    $region44: #{tpu_custom_call.1} parent=5 // pred_fallthru
      _
    %p299 = scmp.le.s32.totalorder 1, %s16
    %p300 = scmp.lt.s32.totalorder %s16, 3
    %p301 = pnand %p299, %p300
    %p302 = pneg %p301
    // Predicated region
    $region53: #{tpu_custom_call.1} parent=5 // pred_check
      _
    $region54: #{tpu_custom_call.1} parent=5 // pred_check_branch
      %304 = sbr.rel (%p301) target = $region56
    $region55: #{tpu_custom_call.1} parent=5 // pred_region
      %s305 = ssub.s32 %s16, 1
      %p306 = pneg %p37
      %p307 = pneg %p34
      %s308 = smul.u32 32, %s21
      %p309 = scmp.lt.s32.totalorder %s308, 63
      %s310 = scalar_select %p309, %s308, 63
      %s311 = smul.addr %s310, 8
      %s312 = scalar_lea.vmem %s1, %s311
      %p313 = pneg %p63
      %p314 = pneg %p60
      %s315 = smul.u32 32, %s21
      %p316 = scmp.lt.s32.totalorder %s315, 63
      %s317 = scalar_select %p316, %s315, 63
      %s318 = smul.addr %s317, 8
      %s319 = scalar_lea.vmem %s2, %s318
      %p320 = pneg %p89
      %p321 = pneg %p86
      %p322 = pneg %p110
      %p323 = pneg %p107
      %p324 = pneg %p131
      %p325 = pneg %p128
      %p326 = pneg %p152
      %p327 = pneg %p149
      %p328 = pneg %p173
      %p329 = pneg %p170
      %p330 = pneg %p194
      %p331 = pneg %p191
      %p332 = pneg %p215
      %p333 = pneg %p212
      %p334 = pneg %p241
      %p335 = pneg %p238
      %s336 = smul.u32 32, %s21
      %p337 = scmp.lt.s32.totalorder %s336, 63
      %s338 = scalar_select %p337, %s336, 63
      %s339 = smul.addr %s338, 8
      %s340 = scalar_lea.vmem %s9, %s339
      %s341 = smul.u32 32, %s21
      %p342 = scmp.lt.s32.totalorder %s341, 63
      %s343 = scalar_select %p342, %s341, 63
      %s344 = smul.addr %s343, 8
      %s345 = scalar_lea.vmem %s1, %s344
      %s346 = smul.u32 32, %s21
      %s347 = smul.u32 32, %s21
      %p348 = scmp.lt.s32.totalorder %s347, 63
      %s349 = scalar_select %p348, %s347, 63
      %s350 = smul.addr %s349, 8
      %s351 = scalar_lea.vmem %s2, %s350
      %s352 = smul.u32 32, %s21
      %s353 = smul.u32 32, %s21
      %p354 = scmp.lt.s32.totalorder %s353, 63
      %s355 = scalar_select %p354, %s353, 63
      %s356 = smul.addr %s355, 8
      %s357 = scalar_lea.vmem %s9, %s356
      %s358 = smul.u32 32, %s21
      %v360 = vld [vmem:[%s345] sm:$0xff]
      %v361 = vld [vmem:[%s345 + $0x8] sm:$0xff]
      %v362 = vld [vmem:[%s345 + $0x10] sm:$0xff]
      %v363 = vld [vmem:[%s345 + $0x18] sm:$0xff]
      %v364 = vld [vmem:[%s345 + $0x20] sm:$0xff]
      %v365 = vld [vmem:[%s345 + $0x28] sm:$0xff]
      %v366 = vld [vmem:[%s345 + $0x30] sm:$0xff]
      %v367 = vld [vmem:[%s345 + $0x38] sm:$0xff]
      %v368 = vld [vmem:[%s345 + $0x40] sm:$0xff]
      %v369 = vld [vmem:[%s345 + $0x48] sm:$0xff]
      %v370 = vld [vmem:[%s345 + $0x50] sm:$0xff]
      %v371 = vld [vmem:[%s345 + $0x58] sm:$0xff]
      %v372 = vld [vmem:[%s345 + $0x60] sm:$0xff]
      %v373 = vld [vmem:[%s345 + $0x68] sm:$0xff]
      %v374 = vld [vmem:[%s345 + $0x70] sm:$0xff]
      %v375 = vld [vmem:[%s345 + $0x78] sm:$0xff]
      %v376 = vld [vmem:[%s345 + $0x80] sm:$0xff]
      %v377 = vld [vmem:[%s345 + $0x88] sm:$0xff]
      %v378 = vld [vmem:[%s345 + $0x90] sm:$0xff]
      %v379 = vld [vmem:[%s345 + $0x98] sm:$0xff]
      %v380 = vld [vmem:[%s345 + $0xa0] sm:$0xff]
      %v381 = vld [vmem:[%s345 + $0xa8] sm:$0xff]
      %v382 = vld [vmem:[%s345 + $0xb0] sm:$0xff]
      %v383 = vld [vmem:[%s345 + $0xb8] sm:$0xff]
      %v384 = vld [vmem:[%s345 + $0xc0] sm:$0xff]
      %v385 = vld [vmem:[%s345 + $0xc8] sm:$0xff]
      %v386 = vld [vmem:[%s345 + $0xd0] sm:$0xff]
      %v387 = vld [vmem:[%s345 + $0xd8] sm:$0xff]
      %v388 = vld [vmem:[%s345 + $0xe0] sm:$0xff]
      %v389 = vld [vmem:[%s345 + $0xe8] sm:$0xff]
      %v390 = vld [vmem:[%s345 + $0xf0] sm:$0xff]
      %v391 = vld [vmem:[%s345 + $0xf8] sm:$0xff]
      %v392 = vpack.c.bf16 %v361, %v360
      %v393 = vpack.c.bf16 %v363, %v362
      %v394 = vpack.c.bf16 %v365, %v364
      %v395 = vpack.c.bf16 %v367, %v366
      %v396 = vpack.c.bf16 %v369, %v368
      %v397 = vpack.c.bf16 %v371, %v370
      %v398 = vpack.c.bf16 %v373, %v372
      %v399 = vpack.c.bf16 %v375, %v374
      %v400 = vpack.c.bf16 %v377, %v376
      %v401 = vpack.c.bf16 %v379, %v378
      %v402 = vpack.c.bf16 %v381, %v380
      %v403 = vpack.c.bf16 %v383, %v382
      %v404 = vpack.c.bf16 %v385, %v384
      %v405 = vpack.c.bf16 %v387, %v386
      %v406 = vpack.c.bf16 %v389, %v388
      %v407 = vpack.c.bf16 %v391, %v390
      %v408 = vld [vmem:[%s3] sm:$0xf]
      %v409 = vld [vmem:[%s3 + $0x4] sm:$0xf]
      %v410 = vld [vmem:[%s3 + $0x8] sm:$0xf]
      %v411 = vld [vmem:[%s3 + $0xc] sm:$0xf]
      %v412 = vld [vmem:[%s6] sm:$0x1]
      %v414 = vlaneseq
      %v415 = vshrl.u32 %v414, 7
      %v416 = vsub.s32 0, %v415
      %v417 = vrot.slane %v412, %v416
      %v423 = vunpack.c.l.b16 %v408
      %v424 = vunpack.c.l.b16 %v409
      %v425 = vunpack.c.l.b16 %v410
      %v426 = vunpack.c.l.b16 %v411
      %v427 = vpack.c.b16 %v424, %v423
      %v428 = vpack.c.b16 %v426, %v425
      %vm431 = vcmask 261120
      %v433 = vsel %vm431, %v392, 0
      %v436 = vsel %vm431, %v393, 0
      %v439 = vsel %vm431, %v394, 0
      %v442 = vsel %vm431, %v395, 0
      %v445 = vsel %vm431, %v396, 0
      %v448 = vsel %vm431, %v397, 0
      %v451 = vsel %vm431, %v398, 0
      %v454 = vsel %vm431, %v399, 0
      %v457 = vsel %vm431, %v400, 0
      %v460 = vsel %vm431, %v401, 0
      %v463 = vsel %vm431, %v402, 0
      %v466 = vsel %vm431, %v403, 0
      %v469 = vsel %vm431, %v404, 0
      %v472 = vsel %vm431, %v405, 0
      %v475 = vsel %vm431, %v406, 0
      %v478 = vsel %vm431, %v407, 0
      %480 = vmatprep.subr.bf16.mxu0 0
      %481 = vmatpush1.bf16.msra.mxu0 %v427
      %482 = vmatprep.subr.bf16.mxu0 0
      %483 = vmatpush1.bf16.msra.mxu0 %v428
      %484 = vmatprep.subr.bf16.mxu0 0
      %485 = vmatpush1.bf16.msra.mxu0 0
      %486 = vmatprep.subr.bf16.mxu0 0
      %487 = vmatpush1.bf16.msra.mxu0 0
      %488 = vmatprep.subr.bf16.mxu0 0
      %489 = vmatpush1.bf16.msra.mxu0 0
      %490 = vmatprep.subr.bf16.mxu0 0
      %491 = vmatpush1.bf16.msra.mxu0 0
      %492 = vmatprep.subr.bf16.mxu0 0
      %493 = vmatpush1.bf16.msra.mxu0 0
      %494 = vmatprep.subr.bf16.mxu0 0
      %495 = vmatpush1.bf16.msra.mxu0 0
      %496 = vmatprep.subr.bf16.mxu0 0
      %497 = vmatpush1.bf16.msra.mxu0 0
      %498 = vmatprep.subr.bf16.mxu0 0
      %499 = vmatpush1.bf16.msra.mxu0 0
      %500 = vmatprep.subr.bf16.mxu0 0
      %501 = vmatpush1.bf16.msra.mxu0 0
      %502 = vmatprep.subr.bf16.mxu0 0
      %503 = vmatpush1.bf16.msra.mxu0 0
      %504 = vmatprep.subr.bf16.mxu0 0
      %505 = vmatpush1.bf16.msra.mxu0 0
      %506 = vmatprep.subr.bf16.mxu0 0
      %507 = vmatpush1.bf16.msra.mxu0 0
      %508 = vmatprep.subr.bf16.mxu0 0
      %509 = vmatpush1.bf16.msra.mxu0 0
      %510 = vmatprep.subr.bf16.mxu0 0
      %511 = vmatpush1.bf16.msra.mxu0 0
      %512 = vmatprep.mubr.bf16.mxu0 0
      %513 = vmatmul.mubr.bf16.gmra.mrb[0].mxu0 %v433
      %v514 = vpop.f32.mrb[0].mxu0
      %v515 = vadd.f32 %v417, %v514
      %v516 = vpop.f32.mrb[0].mxu0
      %v517 = vpop.f32.mrb[0].mxu0
      %v518 = vadd.f32 %v417, %v517
      %v519 = vpop.f32.mrb[0].mxu0
      %520 = vmatprep.mubr.bf16.mxu0 0
      %521 = vmatmul.mubr.bf16.gmra.mrb[0].mxu0 %v436
      %v522 = vpop.f32.mrb[0].mxu0
      %v523 = vadd.f32 %v417, %v522
      %v524 = vpop.f32.mrb[0].mxu0
      %v525 = vpop.f32.mrb[0].mxu0
      %v526 = vadd.f32 %v417, %v525
      %v527 = vpop.f32.mrb[0].mxu0
      %528 = vmatprep.mubr.bf16.mxu0 0
      %529 = vmatmul.mubr.bf16.gmra.mrb[0].mxu0 %v439
      %v530 = vpop.f32.mrb[0].mxu0
      %v531 = vadd.f32 %v417, %v530
      %v532 = vpop.f32.mrb[0].mxu0
      %v533 = vpop.f32.mrb[0].mxu0
      %v534 = vadd.f32 %v417, %v533
      %v535 = vpop.f32.mrb[0].mxu0
      %536 = vmatprep.mubr.bf16.mxu0 0
      %537 = vmatmul.mubr.bf16.gmra.mrb[0].mxu0 %v442
      %v538 = vpop.f32.mrb[0].mxu0
      %v539 = vadd.f32 %v417, %v538
      %v540 = vpop.f32.mrb[0].mxu0
      %v541 = vpop.f32.mrb[0].mxu0
      %v542 = vadd.f32 %v417, %v541
      %v543 = vpop.f32.mrb[0].mxu0
      %544 = vmatprep.mubr.bf16.mxu0 0
      %545 = vmatmul.mubr.bf16.gmra.mrb[0].mxu0 %v445
      %v546 = vpop.f32.mrb[0].mxu0
      %v547 = vadd.f32 %v417, %v546
      %v548 = vpop.f32.mrb[0].mxu0
      %v549 = vpop.f32.mrb[0].mxu0
      %v550 = vadd.f32 %v417, %v549
      %v551 = vpop.f32.mrb[0].mxu0
      %552 = vmatprep.mubr.bf16.mxu0 0
      %553 = vmatmul.mubr.bf16.gmra.mrb[0].mxu0 %v448
      %v554 = vpop.f32.mrb[0].mxu0
      %v555 = vadd.f32 %v417, %v554
      %v556 = vpop.f32.mrb[0].mxu0
      %v557 = vpop.f32.mrb[0].mxu0
      %v558 = vadd.f32 %v417, %v557
      %v559 = vpop.f32.mrb[0].mxu0
      %560 = vmatprep.mubr.bf16.mxu0 0
      %561 = vmatmul.mubr.bf16.gmra.mrb[0].mxu0 %v451
      %v562 = vpop.f32.mrb[0].mxu0
      %v563 = vadd.f32 %v417, %v562
      %v564 = vpop.f32.mrb[0].mxu0
      %v565 = vpop.f32.mrb[0].mxu0
      %v566 = vadd.f32 %v417, %v565
      %v567 = vpop.f32.mrb[0].mxu0
      %568 = vmatprep.mubr.bf16.mxu0 0
      %569 = vmatmul.mubr.bf16.gmra.mrb[0].mxu0 %v454
      %v570 = vpop.f32.mrb[0].mxu0
      %v571 = vadd.f32 %v417, %v570
      %v572 = vpop.f32.mrb[0].mxu0
      %v573 = vpop.f32.mrb[0].mxu0
      %v574 = vadd.f32 %v417, %v573
      %v575 = vpop.f32.mrb[0].mxu0
      %576 = vmatprep.mubr.bf16.mxu0 0
      %577 = vmatmul.mubr.bf16.gmra.mrb[0].mxu0 %v457
      %v578 = vpop.f32.mrb[0].mxu0
      %v579 = vadd.f32 %v417, %v578
      %v580 = vpop.f32.mrb[0].mxu0
      %v581 = vpop.f32.mrb[0].mxu0
      %v582 = vadd.f32 %v417, %v581
      %v583 = vpop.f32.mrb[0].mxu0
      %584 = vmatprep.mubr.bf16.mxu0 0
      %585 = vmatmul.mubr.bf16.gmra.mrb[0].mxu0 %v460
      %v586 = vpop.f32.mrb[0].mxu0
      %v587 = vadd.f32 %v417, %v586
      %v588 = vpop.f32.mrb[0].mxu0
      %v589 = vpop.f32.mrb[0].mxu0
      %v590 = vadd.f32 %v417, %v589
      %v591 = vpop.f32.mrb[0].mxu0
      %592 = vmatprep.mubr.bf16.mxu0 0
      %593 = vmatmul.mubr.bf16.gmra.mrb[0].mxu0 %v463
      %v594 = vpop.f32.mrb[0].mxu0
      %v595 = vadd.f32 %v417, %v594
      %v596 = vpop.f32.mrb[0].mxu0
      %v597 = vpop.f32.mrb[0].mxu0
      %v598 = vadd.f32 %v417, %v597
      %v599 = vpop.f32.mrb[0].mxu0
      %600 = vmatprep.mubr.bf16.mxu0 0
      %601 = vmatmul.mubr.bf16.gmra.mrb[0].mxu0 %v466
      %v602 = vpop.f32.mrb[0].mxu0
      %v603 = vadd.f32 %v417, %v602
      %v604 = vpop.f32.mrb[0].mxu0
      %v605 = vpop.f32.mrb[0].mxu0
      %v606 = vadd.f32 %v417, %v605
      %v607 = vpop.f32.mrb[0].mxu0
      %608 = vmatprep.mubr.bf16.mxu0 0
      %609 = vmatmul.mubr.bf16.gmra.mrb[0].mxu0 %v469
      %v610 = vpop.f32.mrb[0].mxu0
      %v611 = vadd.f32 %v417, %v610
      %v612 = vpop.f32.mrb[0].mxu0
      %v613 = vpop.f32.mrb[0].mxu0
      %v614 = vadd.f32 %v417, %v613
      %v615 = vpop.f32.mrb[0].mxu0
      %616 = vmatprep.mubr.bf16.mxu0 0
      %617 = vmatmul.mubr.bf16.gmra.mrb[0].mxu0 %v472
      %v618 = vpop.f32.mrb[0].mxu0
      %v619 = vadd.f32 %v417, %v618
      %v620 = vpop.f32.mrb[0].mxu0
      %v621 = vpop.f32.mrb[0].mxu0
      %v622 = vadd.f32 %v417, %v621
      %v623 = vpop.f32.mrb[0].mxu0
      %624 = vmatprep.mubr.bf16.mxu0 0
      %625 = vmatmul.mubr.bf16.gmra.mrb[0].mxu0 %v475
      %v626 = vpop.f32.mrb[0].mxu0
      %v627 = vadd.f32 %v417, %v626
      %v628 = vpop.f32.mrb[0].mxu0
      %v629 = vpop.f32.mrb[0].mxu0
      %v630 = vadd.f32 %v417, %v629
      %v631 = vpop.f32.mrb[0].mxu0
      %632 = vmatprep.mubr.bf16.mxu0 0
      %633 = vmatmul.mubr.bf16.gmra.mrb[0].mxu0 %v478
      %v634 = vpop.f32.mrb[0].mxu0
      %v635 = vadd.f32 %v417, %v634
      %v636 = vpop.f32.mrb[0].mxu0
      %v637 = vpop.f32.mrb[0].mxu0
      %v638 = vadd.f32 %v417, %v637
      %v639 = vpop.f32.mrb[0].mxu0
      %640 = vdwg.mxu0
      %v641 = vmax.f32 %v515, 0.0
      %v642 = vmax.f32 %v518, 0.0
      %v643 = vmax.f32 %v523, 0.0
      %v644 = vmax.f32 %v526, 0.0
      %v645 = vmax.f32 %v531, 0.0
      %v646 = vmax.f32 %v534, 0.0
      %v647 = vmax.f32 %v539, 0.0
      %v648 = vmax.f32 %v542, 0.0
      %v649 = vmax.f32 %v547, 0.0
      %v650 = vmax.f32 %v550, 0.0
      %v651 = vmax.f32 %v555, 0.0
      %v652 = vmax.f32 %v558, 0.0
      %v653 = vmax.f32 %v563, 0.0
      %v654 = vmax.f32 %v566, 0.0
      %v655 = vmax.f32 %v571, 0.0
      %v656 = vmax.f32 %v574, 0.0
      %v657 = vmax.f32 %v579, 0.0
      %v658 = vmax.f32 %v582, 0.0
      %v659 = vmax.f32 %v587, 0.0
      %v660 = vmax.f32 %v590, 0.0
      %v661 = vmax.f32 %v595, 0.0
      %v662 = vmax.f32 %v598, 0.0
      %v663 = vmax.f32 %v603, 0.0
      %v664 = vmax.f32 %v606, 0.0
      %v665 = vmax.f32 %v611, 0.0
      %v666 = vmax.f32 %v614, 0.0
      %v667 = vmax.f32 %v619, 0.0
      %v668 = vmax.f32 %v622, 0.0
      %v669 = vmax.f32 %v627, 0.0
      %v670 = vmax.f32 %v630, 0.0
      %v671 = vmax.f32 %v635, 0.0
      %v672 = vmax.f32 %v638, 0.0
      %v673 = vpack.c.bf16 %v642, %v641
      %v674 = vpack.c.bf16 %v644, %v643
      %v675 = vpack.c.bf16 %v646, %v645
      %v676 = vpack.c.bf16 %v648, %v647
      %v677 = vpack.c.bf16 %v650, %v649
      %v678 = vpack.c.bf16 %v652, %v651
      %v679 = vpack.c.bf16 %v654, %v653
      %v680 = vpack.c.bf16 %v656, %v655
      %v681 = vpack.c.bf16 %v658, %v657
      %v682 = vpack.c.bf16 %v660, %v659
      %v683 = vpack.c.bf16 %v662, %v661
      %v684 = vpack.c.bf16 %v664, %v663
      %v685 = vpack.c.bf16 %v666, %v665
      %v686 = vpack.c.bf16 %v668, %v667
      %v687 = vpack.c.bf16 %v670, %v669
      %v688 = vpack.c.bf16 %v672, %v671
      %v689 = vld [vmem:[%s4] sm:$0xf]
      %v690 = vld [vmem:[%s4 + $0x4] sm:$0xf]
      %v691 = vld [vmem:[%s4 + $0x8] sm:$0xf]
      %v692 = vld [vmem:[%s4 + $0xc] sm:$0xf]
      %v693 = vld [vmem:[%s4 + $0x10] sm:$0xf]
      %v694 = vld [vmem:[%s4 + $0x14] sm:$0xf]
      %v695 = vld [vmem:[%s4 + $0x18] sm:$0xf]
      %v696 = vld [vmem:[%s4 + $0x1c] sm:$0xf]
      %v697 = vld [vmem:[%s7] sm:$0x1]
      %v699 = vlaneseq
      %v700 = vshrl.u32 %v699, 7
      %v701 = vsub.s32 0, %v700
      %v702 = vrot.slane %v697, %v701
      %v712 = vunpack.c.l.b16 %v689
      %v713 = vunpack.c.l.b16 %v690
      %v714 = vunpack.c.l.b16 %v691
      %v715 = vunpack.c.l.b16 %v692
      %v716 = vunpack.c.l.b16 %v693
      %v717 = vunpack.c.l.b16 %v694
      %v718 = vunpack.c.l.b16 %v695
      %v719 = vunpack.c.l.b16 %v696
      %v720 = vpack.c.b16 %v713, %v712
      %v721 = vpack.c.b16 %v715, %v714
      %v722 = vpack.c.b16 %v717, %v716
      %v723 = vpack.c.b16 %v719, %v718
      %vm728 = vcmask 523264
      %v730 = vsel %vm728, %v673, 0
      %v733 = vsel %vm728, %v674, 0
      %v736 = vsel %vm728, %v675, 0
      %v739 = vsel %vm728, %v676, 0
      %v742 = vsel %vm728, %v677, 0
      %v745 = vsel %vm728, %v678, 0
      %v748 = vsel %vm728, %v679, 0
      %v751 = vsel %vm728, %v680, 0
      %v754 = vsel %vm728, %v681, 0
      %v757 = vsel %vm728, %v682, 0
      %v760 = vsel %vm728, %v683, 0
      %v763 = vsel %vm728, %v684, 0
      %v766 = vsel %vm728, %v685, 0
      %v769 = vsel %vm728, %v686, 0
      %v772 = vsel %vm728, %v687, 0
      %v775 = vsel %vm728, %v688, 0
      %777 = vmatprep.subr.bf16.mxu0 0
      %778 = vmatpush1.bf16.msra.mxu0 %v720
      %779 = vmatprep.subr.bf16.mxu0 0
      %780 = vmatpush1.bf16.msra.mxu0 %v721
      %781 = vmatprep.subr.bf16.mxu0 0
      %782 = vmatpush1.bf16.msra.mxu0 %v722
      %783 = vmatprep.subr.bf16.mxu0 0
      %784 = vmatpush1.bf16.msra.mxu0 %v723
      %785 = vmatprep.subr.bf16.mxu0 0
      %786 = vmatpush1.bf16.msra.mxu0 0
      %787 = vmatprep.subr.bf16.mxu0 0
      %788 = vmatpush1.bf16.msra.mxu0 0
      %789 = vmatprep.subr.bf16.mxu0 0
      %790 = vmatpush1.bf16.msra.mxu0 0
      %791 = vmatprep.subr.bf16.mxu0 0
      %792 = vmatpush1.bf16.msra.mxu0 0
      %793 = vmatprep.subr.bf16.mxu0 0
      %794 = vmatpush1.bf16.msra.mxu0 0
      %795 = vmatprep.subr.bf16.mxu0 0
      %796 = vmatpush1.bf16.msra.mxu0 0
      %797 = vmatprep.subr.bf16.mxu0 0
      %798 = vmatpush1.bf16.msra.mxu0 0
      %799 = vmatprep.subr.bf16.mxu0 0
      %800 = vmatpush1.bf16.msra.mxu0 0
      %801 = vmatprep.subr.bf16.mxu0 0
      %802 = vmatpush1.bf16.msra.mxu0 0
      %803 = vmatprep.subr.bf16.mxu0 0
      %804 = vmatpush1.bf16.msra.mxu0 0
      %805 = vmatprep.subr.bf16.mxu0 0
      %806 = vmatpush1.bf16.msra.mxu0 0
      %807 = vmatprep.subr.bf16.mxu0 0
      %808 = vmatpush1.bf16.msra.mxu0 0
      %809 = vmatprep.mubr.bf16.mxu0 0
      %810 = vmatmul.mubr.bf16.gmra.mrb[0].mxu0 %v730
      %v811 = vpop.f32.mrb[0].mxu0
      %v812 = vadd.f32 %v702, %v811
      %v813 = vpop.f32.mrb[0].mxu0
      %v814 = vpop.f32.mrb[0].mxu0
      %v815 = vadd.f32 %v702, %v814
      %v816 = vpop.f32.mrb[0].mxu0
      %817 = vmatprep.mubr.bf16.mxu0 0
      %818 = vmatmul.mubr.bf16.gmra.mrb[0].mxu0 %v733
      %v819 = vpop.f32.mrb[0].mxu0
      %v820 = vadd.f32 %v702, %v819
      %v821 = vpop.f32.mrb[0].mxu0
      %v822 = vpop.f32.mrb[0].mxu0
      %v823 = vadd.f32 %v702, %v822
      %v824 = vpop.f32.mrb[0].mxu0
      %825 = vmatprep.mubr.bf16.mxu0 0
      %826 = vmatmul.mubr.bf16.gmra.mrb[0].mxu0 %v736
      %v827 = vpop.f32.mrb[0].mxu0
      %v828 = vadd.f32 %v702, %v827
      %v829 = vpop.f32.mrb[0].mxu0
      %v830 = vpop.f32.mrb[0].mxu0
      %v831 = vadd.f32 %v702, %v830
      %v832 = vpop.f32.mrb[0].mxu0
      %833 = vmatprep.mubr.bf16.mxu0 0
      %834 = vmatmul.mubr.bf16.gmra.mrb[0].mxu0 %v739
      %v835 = vpop.f32.mrb[0].mxu0
      %v836 = vadd.f32 %v702, %v835
      %v837 = vpop.f32.mrb[0].mxu0
      %v838 = vpop.f32.mrb[0].mxu0
      %v839 = vadd.f32 %v702, %v838
      %v840 = vpop.f32.mrb[0].mxu0
      %841 = vmatprep.mubr.bf16.mxu0 0
      %842 = vmatmul.mubr.bf16.gmra.mrb[0].mxu0 %v742
      %v843 = vpop.f32.mrb[0].mxu0
      %v844 = vadd.f32 %v702, %v843
      %v845 = vpop.f32.mrb[0].mxu0
      %v846 = vpop.f32.mrb[0].mxu0
      %v847 = vadd.f32 %v702, %v846
      %v848 = vpop.f32.mrb[0].mxu0
      %849 = vmatprep.mubr.bf16.mxu0 0
      %850 = vmatmul.mubr.bf16.gmra.mrb[0].mxu0 %v745
      %v851 = vpop.f32.mrb[0].mxu0
      %v852 = vadd.f32 %v702, %v851
      %v853 = vpop.f32.mrb[0].mxu0
      %v854 = vpop.f32.mrb[0].mxu0
      %v855 = vadd.f32 %v702, %v854
      %v856 = vpop.f32.mrb[0].mxu0
      %857 = vmatprep.mubr.bf16.mxu0 0
      %858 = vmatmul.mubr.bf16.gmra.mrb[0].mxu0 %v748
      %v859 = vpop.f32.mrb[0].mxu0
      %v860 = vadd.f32 %v702, %v859
      %v861 = vpop.f32.mrb[0].mxu0
      %v862 = vpop.f32.mrb[0].mxu0
      %v863 = vadd.f32 %v702, %v862
      %v864 = vpop.f32.mrb[0].mxu0
      %865 = vmatprep.mubr.bf16.mxu0 0
      %866 = vmatmul.mubr.bf16.gmra.mrb[0].mxu0 %v751
      %v867 = vpop.f32.mrb[0].mxu0
      %v868 = vadd.f32 %v702, %v867
      %v869 = vpop.f32.mrb[0].mxu0
      %v870 = vpop.f32.mrb[0].mxu0
      %v871 = vadd.f32 %v702, %v870
      %v872 = vpop.f32.mrb[0].mxu0
      %873 = vmatprep.mubr.bf16.mxu0 0
      %874 = vmatmul.mubr.bf16.gmra.mrb[0].mxu0 %v754
      %v875 = vpop.f32.mrb[0].mxu0
      %v876 = vadd.f32 %v702, %v875
      %v877 = vpop.f32.mrb[0].mxu0
      %v878 = vpop.f32.mrb[0].mxu0
      %v879 = vadd.f32 %v702, %v878
      %v880 = vpop.f32.mrb[0].mxu0
      %881 = vmatprep.mubr.bf16.mxu0 0
      %882 = vmatmul.mubr.bf16.gmra.mrb[0].mxu0 %v757
      %v883 = vpop.f32.mrb[0].mxu0
      %v884 = vadd.f32 %v702, %v883
      %v885 = vpop.f32.mrb[0].mxu0
      %v886 = vpop.f32.mrb[0].mxu0
      %v887 = vadd.f32 %v702, %v886
      %v888 = vpop.f32.mrb[0].mxu0
      %889 = vmatprep.mubr.bf16.mxu0 0
      %890 = vmatmul.mubr.bf16.gmra.mrb[0].mxu0 %v760
      %v891 = vpop.f32.mrb[0].mxu0
      %v892 = vadd.f32 %v702, %v891
      %v893 = vpop.f32.mrb[0].mxu0
      %v894 = vpop.f32.mrb[0].mxu0
      %v895 = vadd.f32 %v702, %v894
      %v896 = vpop.f32.mrb[0].mxu0
      %897 = vmatprep.mubr.bf16.mxu0 0
      %898 = vmatmul.mubr.bf16.gmra.mrb[0].mxu0 %v763
      %v899 = vpop.f32.mrb[0].mxu0
      %v900 = vadd.f32 %v702, %v899
      %v901 = vpop.f32.mrb[0].mxu0
      %v902 = vpop.f32.mrb[0].mxu0
      %v903 = vadd.f32 %v702, %v902
      %v904 = vpop.f32.mrb[0].mxu0
      %905 = vmatprep.mubr.bf16.mxu0 0
      %906 = vmatmul.mubr.bf16.gmra.mrb[0].mxu0 %v766
      %v907 = vpop.f32.mrb[0].mxu0
      %v908 = vadd.f32 %v702, %v907
      %v909 = vpop.f32.mrb[0].mxu0
      %v910 = vpop.f32.mrb[0].mxu0
      %v911 = vadd.f32 %v702, %v910
      %v912 = vpop.f32.mrb[0].mxu0
      %913 = vmatprep.mubr.bf16.mxu0 0
      %914 = vmatmul.mubr.bf16.gmra.mrb[0].mxu0 %v769
      %v915 = vpop.f32.mrb[0].mxu0
      %v916 = vadd.f32 %v702, %v915
      %v917 = vpop.f32.mrb[0].mxu0
      %v918 = vpop.f32.mrb[0].mxu0
      %v919 = vadd.f32 %v702, %v918
      %v920 = vpop.f32.mrb[0].mxu0
      %921 = vmatprep.mubr.bf16.mxu0 0
      %922 = vmatmul.mubr.bf16.gmra.mrb[0].mxu0 %v772
      %v923 = vpop.f32.mrb[0].mxu0
      %v924 = vadd.f32 %v702, %v923
      %v925 = vpop.f32.mrb[0].mxu0
      %v926 = vpop.f32.mrb[0].mxu0
      %v927 = vadd.f32 %v702, %v926
      %v928 = vpop.f32.mrb[0].mxu0
      %929 = vmatprep.mubr.bf16.mxu0 0
      %930 = vmatmul.mubr.bf16.gmra.mrb[0].mxu0 %v775
      %v931 = vpop.f32.mrb[0].mxu0
      %v932 = vadd.f32 %v702, %v931
      %v933 = vpop.f32.mrb[0].mxu0
      %v934 = vpop.f32.mrb[0].mxu0
      %v935 = vadd.f32 %v702, %v934
      %v936 = vpop.f32.mrb[0].mxu0
      %937 = vdwg.mxu0
      %v938 = vmax.f32 %v812, 0.0
      %v939 = vmax.f32 %v815, 0.0
      %v940 = vmax.f32 %v820, 0.0
      %v941 = vmax.f32 %v823, 0.0
      %v942 = vmax.f32 %v828, 0.0
      %v943 = vmax.f32 %v831, 0.0
      %v944 = vmax.f32 %v836, 0.0
      %v945 = vmax.f32 %v839, 0.0
      %v946 = vmax.f32 %v844, 0.0
      %v947 = vmax.f32 %v847, 0.0
      %v948 = vmax.f32 %v852, 0.0
      %v949 = vmax.f32 %v855, 0.0
      %v950 = vmax.f32 %v860, 0.0
      %v951 = vmax.f32 %v863, 0.0
      %v952 = vmax.f32 %v868, 0.0
      %v953 = vmax.f32 %v871, 0.0
      %v954 = vmax.f32 %v876, 0.0
      %v955 = vmax.f32 %v879, 0.0
      %v956 = vmax.f32 %v884, 0.0
      %v957 = vmax.f32 %v887, 0.0
      %v958 = vmax.f32 %v892, 0.0
      %v959 = vmax.f32 %v895, 0.0
      %v960 = vmax.f32 %v900, 0.0
      %v961 = vmax.f32 %v903, 0.0
      %v962 = vmax.f32 %v908, 0.0
      %v963 = vmax.f32 %v911, 0.0
      %v964 = vmax.f32 %v916, 0.0
      %v965 = vmax.f32 %v919, 0.0
      %v966 = vmax.f32 %v924, 0.0
      %v967 = vmax.f32 %v927, 0.0
      %v968 = vmax.f32 %v932, 0.0
      %v969 = vmax.f32 %v935, 0.0
      %v970 = vpack.c.bf16 %v939, %v938
      %v971 = vpack.c.bf16 %v941, %v940
      %v972 = vpack.c.bf16 %v943, %v942
      %v973 = vpack.c.bf16 %v945, %v944
      %v974 = vpack.c.bf16 %v947, %v946
      %v975 = vpack.c.bf16 %v949, %v948
      %v976 = vpack.c.bf16 %v951, %v950
      %v977 = vpack.c.bf16 %v953, %v952
      %v978 = vpack.c.bf16 %v955, %v954
      %v979 = vpack.c.bf16 %v957, %v956
      %v980 = vpack.c.bf16 %v959, %v958
      %v981 = vpack.c.bf16 %v961, %v960
      %v982 = vpack.c.bf16 %v963, %v962
      %v983 = vpack.c.bf16 %v965, %v964
      %v984 = vpack.c.bf16 %v967, %v966
      %v985 = vpack.c.bf16 %v969, %v968
      %v986 = vld [vmem:[%s5] sm:$0xf]
      %v987 = vld [vmem:[%s5 + $0x4] sm:$0xf]
      %v988 = vld [vmem:[%s5 + $0x8] sm:$0xf]
      %v989 = vld [vmem:[%s5 + $0xc] sm:$0xf]
      %v990 = vld [vmem:[%s5 + $0x10] sm:$0xf]
      %v991 = vld [vmem:[%s5 + $0x14] sm:$0xf]
      %v992 = vld [vmem:[%s5 + $0x18] sm:$0xf]
      %v993 = vld [vmem:[%s5 + $0x1c] sm:$0xf]
      %v994 = vld [vmem:[%s8] sm:$0x1]
      %v996 = vlaneseq
      %v997 = vshrl.u32 %v996, 7
      %v998 = vsub.s32 0, %v997
      %v999 = vrot.slane %v994, %v998
      %v1009 = vunpack.c.l.b16 %v986
      %v1010 = vunpack.c.l.b16 %v987
      %v1011 = vunpack.c.l.b16 %v988
      %v1012 = vunpack.c.l.b16 %v989
      %v1013 = vunpack.c.l.b16 %v990
      %v1014 = vunpack.c.l.b16 %v991
      %v1015 = vunpack.c.l.b16 %v992
      %v1016 = vunpack.c.l.b16 %v993
      %v1017 = vpack.c.b16 %v1010, %v1009
      %v1018 = vpack.c.b16 %v1012, %v1011
      %v1019 = vpack.c.b16 %v1014, %v1013
      %v1020 = vpack.c.b16 %v1016, %v1015
      %v1026 = vsel %vm728, %v970, 0
      %v1029 = vsel %vm728, %v971, 0
      %v1032 = vsel %vm728, %v972, 0
      %v1035 = vsel %vm728, %v973, 0
      %v1038 = vsel %vm728, %v974, 0
      %v1041 = vsel %vm728, %v975, 0
      %v1044 = vsel %vm728, %v976, 0
      %v1047 = vsel %vm728, %v977, 0
      %v1050 = vsel %vm728, %v978, 0
      %v1053 = vsel %vm728, %v979, 0
      %v1056 = vsel %vm728, %v980, 0
      %v1059 = vsel %vm728, %v981, 0
      %v1062 = vsel %vm728, %v982, 0
      %v1065 = vsel %vm728, %v983, 0
      %v1068 = vsel %vm728, %v984, 0
      %v1071 = vsel %vm728, %v985, 0
      %1073 = vmatprep.subr.bf16.mxu0 0
      %1074 = vmatpush1.bf16.msra.mxu0 %v1017
      %1075 = vmatprep.subr.bf16.mxu0 0
      %1076 = vmatpush1.bf16.msra.mxu0 %v1018
      %1077 = vmatprep.subr.bf16.mxu0 0
      %1078 = vmatpush1.bf16.msra.mxu0 %v1019
      %1079 = vmatprep.subr.bf16.mxu0 0
      %1080 = vmatpush1.bf16.msra.mxu0 %v1020
      %1081 = vmatprep.subr.bf16.mxu0 0
      %1082 = vmatpush1.bf16.msra.mxu0 0
      %1083 = vmatprep.subr.bf16.mxu0 0
      %1084 = vmatpush1.bf16.msra.mxu0 0
      %1085 = vmatprep.subr.bf16.mxu0 0
      %1086 = vmatpush1.bf16.msra.mxu0 0
      %1087 = vmatprep.subr.bf16.mxu0 0
      %1088 = vmatpush1.bf16.msra.mxu0 0
      %1089 = vmatprep.subr.bf16.mxu0 0
      %1090 = vmatpush1.bf16.msra.mxu0 0
      %1091 = vmatprep.subr.bf16.mxu0 0
      %1092 = vmatpush1.bf16.msra.mxu0 0
      %1093 = vmatprep.subr.bf16.mxu0 0
      %1094 = vmatpush1.bf16.msra.mxu0 0
      %1095 = vmatprep.subr.bf16.mxu0 0
      %1096 = vmatpush1.bf16.msra.mxu0 0
      %1097 = vmatprep.subr.bf16.mxu0 0
      %1098 = vmatpush1.bf16.msra.mxu0 0
      %1099 = vmatprep.subr.bf16.mxu0 0
      %1100 = vmatpush1.bf16.msra.mxu0 0
      %1101 = vmatprep.subr.bf16.mxu0 0
      %1102 = vmatpush1.bf16.msra.mxu0 0
      %1103 = vmatprep.subr.bf16.mxu0 0
      %1104 = vmatpush1.bf16.msra.mxu0 0
      %1105 = vmatprep.mubr.bf16.mxu0 0
      %1106 = vmatmul.mubr.bf16.gmra.mrb[0].mxu0 %v1026
      %v1107 = vpop.f32.mrb[0].mxu0
      %v1108 = vadd.f32 %v999, %v1107
      %v1109 = vpop.f32.mrb[0].mxu0
      %v1110 = vpop.f32.mrb[0].mxu0
      %v1111 = vadd.f32 %v999, %v1110
      %v1112 = vpop.f32.mrb[0].mxu0
      %1113 = vmatprep.mubr.bf16.mxu0 0
      %1114 = vmatmul.mubr.bf16.gmra.mrb[0].mxu0 %v1029
      %v1115 = vpop.f32.mrb[0].mxu0
      %v1116 = vadd.f32 %v999, %v1115
      %v1117 = vpop.f32.mrb[0].mxu0
      %v1118 = vpop.f32.mrb[0].mxu0
      %v1119 = vadd.f32 %v999, %v1118
      %v1120 = vpop.f32.mrb[0].mxu0
      %1121 = vmatprep.mubr.bf16.mxu0 0
      %1122 = vmatmul.mubr.bf16.gmra.mrb[0].mxu0 %v1032
      %v1123 = vpop.f32.mrb[0].mxu0
      %v1124 = vadd.f32 %v999, %v1123
      %v1125 = vpop.f32.mrb[0].mxu0
      %v1126 = vpop.f32.mrb[0].mxu0
      %v1127 = vadd.f32 %v999, %v1126
      %v1128 = vpop.f32.mrb[0].mxu0
      %1129 = vmatprep.mubr.bf16.mxu0 0
      %1130 = vmatmul.mubr.bf16.gmra.mrb[0].mxu0 %v1035
      %v1131 = vpop.f32.mrb[0].mxu0
      %v1132 = vadd.f32 %v999, %v1131
      %v1133 = vpop.f32.mrb[0].mxu0
      %v1134 = vpop.f32.mrb[0].mxu0
      %v1135 = vadd.f32 %v999, %v1134
      %v1136 = vpop.f32.mrb[0].mxu0
      %1137 = vmatprep.mubr.bf16.mxu0 0
      %1138 = vmatmul.mubr.bf16.gmra.mrb[0].mxu0 %v1038
      %v1139 = vpop.f32.mrb[0].mxu0
      %v1140 = vadd.f32 %v999, %v1139
      %v1141 = vpop.f32.mrb[0].mxu0
      %v1142 = vpop.f32.mrb[0].mxu0
      %v1143 = vadd.f32 %v999, %v1142
      %v1144 = vpop.f32.mrb[0].mxu0
      %1145 = vmatprep.mubr.bf16.mxu0 0
      %1146 = vmatmul.mubr.bf16.gmra.mrb[0].mxu0 %v1041
      %v1147 = vpop.f32.mrb[0].mxu0
      %v1148 = vadd.f32 %v999, %v1147
      %v1149 = vpop.f32.mrb[0].mxu0
      %v1150 = vpop.f32.mrb[0].mxu0
      %v1151 = vadd.f32 %v999, %v1150
      %v1152 = vpop.f32.mrb[0].mxu0
      %1153 = vmatprep.mubr.bf16.mxu0 0
      %1154 = vmatmul.mubr.bf16.gmra.mrb[0].mxu0 %v1044
      %v1155 = vpop.f32.mrb[0].mxu0
      %v1156 = vadd.f32 %v999, %v1155
      %v1157 = vpop.f32.mrb[0].mxu0
      %v1158 = vpop.f32.mrb[0].mxu0
      %v1159 = vadd.f32 %v999, %v1158
      %v1160 = vpop.f32.mrb[0].mxu0
      %1161 = vmatprep.mubr.bf16.mxu0 0
      %1162 = vmatmul.mubr.bf16.gmra.mrb[0].mxu0 %v1047
      %v1163 = vpop.f32.mrb[0].mxu0
      %v1164 = vadd.f32 %v999, %v1163
      %v1165 = vpop.f32.mrb[0].mxu0
      %v1166 = vpop.f32.mrb[0].mxu0
      %v1167 = vadd.f32 %v999, %v1166
      %v1168 = vpop.f32.mrb[0].mxu0
      %1169 = vmatprep.mubr.bf16.mxu0 0
      %1170 = vmatmul.mubr.bf16.gmra.mrb[0].mxu0 %v1050
      %v1171 = vpop.f32.mrb[0].mxu0
      %v1172 = vadd.f32 %v999, %v1171
      %v1173 = vpop.f32.mrb[0].mxu0
      %v1174 = vpop.f32.mrb[0].mxu0
      %v1175 = vadd.f32 %v999, %v1174
      %v1176 = vpop.f32.mrb[0].mxu0
      %1177 = vmatprep.mubr.bf16.mxu0 0
      %1178 = vmatmul.mubr.bf16.gmra.mrb[0].mxu0 %v1053
      %v1179 = vpop.f32.mrb[0].mxu0
      %v1180 = vadd.f32 %v999, %v1179
      %v1181 = vpop.f32.mrb[0].mxu0
      %v1182 = vpop.f32.mrb[0].mxu0
      %v1183 = vadd.f32 %v999, %v1182
      %v1184 = vpop.f32.mrb[0].mxu0
      %1185 = vmatprep.mubr.bf16.mxu0 0
      %1186 = vmatmul.mubr.bf16.gmra.mrb[0].mxu0 %v1056
      %v1187 = vpop.f32.mrb[0].mxu0
      %v1188 = vadd.f32 %v999, %v1187
      %v1189 = vpop.f32.mrb[0].mxu0
      %v1190 = vpop.f32.mrb[0].mxu0
      %v1191 = vadd.f32 %v999, %v1190
      %v1192 = vpop.f32.mrb[0].mxu0
      %1193 = vmatprep.mubr.bf16.mxu0 0
      %1194 = vmatmul.mubr.bf16.gmra.mrb[0].mxu0 %v1059
      %v1195 = vpop.f32.mrb[0].mxu0
      %v1196 = vadd.f32 %v999, %v1195
      %v1197 = vpop.f32.mrb[0].mxu0
      %v1198 = vpop.f32.mrb[0].mxu0
      %v1199 = vadd.f32 %v999, %v1198
      %v1200 = vpop.f32.mrb[0].mxu0
      %1201 = vmatprep.mubr.bf16.mxu0 0
      %1202 = vmatmul.mubr.bf16.gmra.mrb[0].mxu0 %v1062
      %v1203 = vpop.f32.mrb[0].mxu0
      %v1204 = vadd.f32 %v999, %v1203
      %v1205 = vpop.f32.mrb[0].mxu0
      %v1206 = vpop.f32.mrb[0].mxu0
      %v1207 = vadd.f32 %v999, %v1206
      %v1208 = vpop.f32.mrb[0].mxu0
      %1209 = vmatprep.mubr.bf16.mxu0 0
      %1210 = vmatmul.mubr.bf16.gmra.mrb[0].mxu0 %v1065
      %v1211 = vpop.f32.mrb[0].mxu0
      %v1212 = vadd.f32 %v999, %v1211
      %v1213 = vpop.f32.mrb[0].mxu0
      %v1214 = vpop.f32.mrb[0].mxu0
      %v1215 = vadd.f32 %v999, %v1214
      %v1216 = vpop.f32.mrb[0].mxu0
      %1217 = vmatprep.mubr.bf16.mxu0 0
      %1218 = vmatmul.mubr.bf16.gmra.mrb[0].mxu0 %v1068
      %v1219 = vpop.f32.mrb[0].mxu0
      %v1220 = vadd.f32 %v999, %v1219
      %v1221 = vpop.f32.mrb[0].mxu0
      %v1222 = vpop.f32.mrb[0].mxu0
      %v1223 = vadd.f32 %v999, %v1222
      %v1224 = vpop.f32.mrb[0].mxu0
      %1225 = vmatprep.mubr.bf16.mxu0 0
      %1226 = vmatmul.mubr.bf16.gmra.mrb[0].mxu0 %v1071
      %v1227 = vpop.f32.mrb[0].mxu0
      %v1228 = vadd.f32 %v999, %v1227
      %v1229 = vpop.f32.mrb[0].mxu0
      %v1230 = vpop.f32.mrb[0].mxu0
      %v1231 = vadd.f32 %v999, %v1230
      %v1232 = vpop.f32.mrb[0].mxu0
      %1233 = vdwg.mxu0
      %v1234 = vmul.f32 %v1108, 1.442695
      %v1235 = vpow.pop %v1234
      %v1236 = vmul.f32 %v1111, 1.442695
      %v1237 = vpow.pop %v1236
      %v1238 = vmul.f32 %v1116, 1.442695
      %v1239 = vpow.pop %v1238
      %v1240 = vmul.f32 %v1119, 1.442695
      %v1241 = vpow.pop %v1240
      %v1242 = vmul.f32 %v1124, 1.442695
      %v1243 = vpow.pop %v1242
      %v1244 = vmul.f32 %v1127, 1.442695
      %v1245 = vpow.pop %v1244
      %v1246 = vmul.f32 %v1132, 1.442695
      %v1247 = vpow.pop %v1246
      %v1248 = vmul.f32 %v1135, 1.442695
      %v1249 = vpow.pop %v1248
      %v1250 = vmul.f32 %v1140, 1.442695
      %v1251 = vpow.pop %v1250
      %v1252 = vmul.f32 %v1143, 1.442695
      %v1253 = vpow.pop %v1252
      %v1254 = vmul.f32 %v1148, 1.442695
      %v1255 = vpow.pop %v1254
      %v1256 = vmul.f32 %v1151, 1.442695
      %v1257 = vpow.pop %v1256
      %v1258 = vmul.f32 %v1156, 1.442695
      %v1259 = vpow.pop %v1258
      %v1260 = vmul.f32 %v1159, 1.442695
      %v1261 = vpow.pop %v1260
      %v1262 = vmul.f32 %v1164, 1.442695
      %v1263 = vpow.pop %v1262
      %v1264 = vmul.f32 %v1167, 1.442695
      %v1265 = vpow.pop %v1264
      %v1266 = vmul.f32 %v1172, 1.442695
      %v1267 = vpow.pop %v1266
      %v1268 = vmul.f32 %v1175, 1.442695
      %v1269 = vpow.pop %v1268
      %v1270 = vmul.f32 %v1180, 1.442695
      %v1271 = vpow.pop %v1270
      %v1272 = vmul.f32 %v1183, 1.442695
      %v1273 = vpow.pop %v1272
      %v1274 = vmul.f32 %v1188, 1.442695
      %v1275 = vpow.pop %v1274
      %v1276 = vmul.f32 %v1191, 1.442695
      %v1277 = vpow.pop %v1276
      %v1278 = vmul.f32 %v1196, 1.442695
      %v1279 = vpow.pop %v1278
      %v1280 = vmul.f32 %v1199, 1.442695
      %v1281 = vpow.pop %v1280
      %v1282 = vmul.f32 %v1204, 1.442695
      %v1283 = vpow.pop %v1282
      %v1284 = vmul.f32 %v1207, 1.442695
      %v1285 = vpow.pop %v1284
      %v1286 = vmul.f32 %v1212, 1.442695
      %v1287 = vpow.pop %v1286
      %v1288 = vmul.f32 %v1215, 1.442695
      %v1289 = vpow.pop %v1288
      %v1290 = vmul.f32 %v1220, 1.442695
      %v1291 = vpow.pop %v1290
      %v1292 = vmul.f32 %v1223, 1.442695
      %v1293 = vpow.pop %v1292
      %v1294 = vmul.f32 %v1228, 1.442695
      %v1295 = vpow.pop %v1294
      %v1296 = vmul.f32 %v1231, 1.442695
      %v1297 = vpow.pop %v1296
      %s1298 = sld [smem:[#allocation2]]
      %v1299 = vld [vmem:[%s351] sm:$0xff]
      %v1300 = vld [vmem:[%s351 + $0x8] sm:$0xff]
      %v1301 = vld [vmem:[%s351 + $0x10] sm:$0xff]
      %v1302 = vld [vmem:[%s351 + $0x18] sm:$0xff]
      %v1303 = vld [vmem:[%s351 + $0x20] sm:$0xff]
      %v1304 = vld [vmem:[%s351 + $0x28] sm:$0xff]
      %v1305 = vld [vmem:[%s351 + $0x30] sm:$0xff]
      %v1306 = vld [vmem:[%s351 + $0x38] sm:$0xff]
      %v1307 = vld [vmem:[%s351 + $0x40] sm:$0xff]
      %v1308 = vld [vmem:[%s351 + $0x48] sm:$0xff]
      %v1309 = vld [vmem:[%s351 + $0x50] sm:$0xff]
      %v1310 = vld [vmem:[%s351 + $0x58] sm:$0xff]
      %v1311 = vld [vmem:[%s351 + $0x60] sm:$0xff]
      %v1312 = vld [vmem:[%s351 + $0x68] sm:$0xff]
      %v1313 = vld [vmem:[%s351 + $0x70] sm:$0xff]
      %v1314 = vld [vmem:[%s351 + $0x78] sm:$0xff]
      %v1315 = vld [vmem:[%s351 + $0x80] sm:$0xff]
      %v1316 = vld [vmem:[%s351 + $0x88] sm:$0xff]
      %v1317 = vld [vmem:[%s351 + $0x90] sm:$0xff]
      %v1318 = vld [vmem:[%s351 + $0x98] sm:$0xff]
      %v1319 = vld [vmem:[%s351 + $0xa0] sm:$0xff]
      %v1320 = vld [vmem:[%s351 + $0xa8] sm:$0xff]
      %v1321 = vld [vmem:[%s351 + $0xb0] sm:$0xff]
      %v1322 = vld [vmem:[%s351 + $0xb8] sm:$0xff]
      %v1323 = vld [vmem:[%s351 + $0xc0] sm:$0xff]
      %v1324 = vld [vmem:[%s351 + $0xc8] sm:$0xff]
      %v1325 = vld [vmem:[%s351 + $0xd0] sm:$0xff]
      %v1326 = vld [vmem:[%s351 + $0xd8] sm:$0xff]
      %v1327 = vld [vmem:[%s351 + $0xe0] sm:$0xff]
      %v1328 = vld [vmem:[%s351 + $0xe8] sm:$0xff]
      %v1329 = vld [vmem:[%s351 + $0xf0] sm:$0xff]
      %v1330 = vld [vmem:[%s351 + $0xf8] sm:$0xff]
      %1363 = vrot.lane.b32.xlu0 %v1299, 1
      %v1364 = vpop.permute.xlu0 %1363
      %1365 = vrot.lane.b32.xlu0 %v1300, 1
      %v1366 = vpop.permute.xlu0 %1365
      %1367 = vrot.lane.b32.xlu0 %v1301, 1
      %v1368 = vpop.permute.xlu0 %1367
      %1369 = vrot.lane.b32.xlu0 %v1302, 1
      %v1370 = vpop.permute.xlu0 %1369
      %1371 = vrot.lane.b32.xlu0 %v1303, 1
      %v1372 = vpop.permute.xlu0 %1371
      %1373 = vrot.lane.b32.xlu0 %v1304, 1
      %v1374 = vpop.permute.xlu0 %1373
      %1375 = vrot.lane.b32.xlu0 %v1305, 1
      %v1376 = vpop.permute.xlu0 %1375
      %1377 = vrot.lane.b32.xlu0 %v1306, 1
      %v1378 = vpop.permute.xlu0 %1377
      %1379 = vrot.lane.b32.xlu0 %v1307, 1
      %v1380 = vpop.permute.xlu0 %1379
      %1381 = vrot.lane.b32.xlu0 %v1308, 1
      %v1382 = vpop.permute.xlu0 %1381
      %1383 = vrot.lane.b32.xlu0 %v1309, 1
      %v1384 = vpop.permute.xlu0 %1383
      %1385 = vrot.lane.b32.xlu0 %v1310, 1
      %v1386 = vpop.permute.xlu0 %1385
      %1387 = vrot.lane.b32.xlu0 %v1311, 1
      %v1388 = vpop.permute.xlu0 %1387
      %1389 = vrot.lane.b32.xlu0 %v1312, 1
      %v1390 = vpop.permute.xlu0 %1389
      %1391 = vrot.lane.b32.xlu0 %v1313, 1
      %v1392 = vpop.permute.xlu0 %1391
      %1393 = vrot.lane.b32.xlu0 %v1314, 1
      %v1394 = vpop.permute.xlu0 %1393
      %1395 = vrot.lane.b32.xlu0 %v1315, 1
      %v1396 = vpop.permute.xlu0 %1395
      %1397 = vrot.lane.b32.xlu0 %v1316, 1
      %v1398 = vpop.permute.xlu0 %1397
      %1399 = vrot.lane.b32.xlu0 %v1317, 1
      %v1400 = vpop.permute.xlu0 %1399
      %1401 = vrot.lane.b32.xlu0 %v1318, 1
      %v1402 = vpop.permute.xlu0 %1401
      %1403 = vrot.lane.b32.xlu0 %v1319, 1
      %v1404 = vpop.permute.xlu0 %1403
      %1405 = vrot.lane.b32.xlu0 %v1320, 1
      %v1406 = vpop.permute.xlu0 %1405
      %1407 = vrot.lane.b32.xlu0 %v1321, 1
      %v1408 = vpop.permute.xlu0 %1407
      %1409 = vrot.lane.b32.xlu0 %v1322, 1
      %v1410 = vpop.permute.xlu0 %1409
      %1411 = vrot.lane.b32.xlu0 %v1323, 1
      %v1412 = vpop.permute.xlu0 %1411
      %1413 = vrot.lane.b32.xlu0 %v1324, 1
      %v1414 = vpop.permute.xlu0 %1413
      %1415 = vrot.lane.b32.xlu0 %v1325, 1
      %v1416 = vpop.permute.xlu0 %1415
      %1417 = vrot.lane.b32.xlu0 %v1326, 1
      %v1418 = vpop.permute.xlu0 %1417
      %1419 = vrot.lane.b32.xlu0 %v1327, 1
      %v1420 = vpop.permute.xlu0 %1419
      %1421 = vrot.lane.b32.xlu0 %v1328, 1
      %v1422 = vpop.permute.xlu0 %1421
      %1423 = vrot.lane.b32.xlu0 %v1329, 1
      %v1424 = vpop.permute.xlu0 %1423
      %1425 = vrot.lane.b32.xlu0 %v1330, 1
      %v1426 = vpop.permute.xlu0 %1425
      %v1459 = vmul.f32 %v1235, %v1364
      %v1460 = vmul.f32 %v1237, %v1366
      %v1461 = vmul.f32 %v1239, %v1368
      %v1462 = vmul.f32 %v1241, %v1370
      %v1463 = vmul.f32 %v1243, %v1372
      %v1464 = vmul.f32 %v1245, %v1374
      %v1465 = vmul.f32 %v1247, %v1376
      %v1466 = vmul.f32 %v1249, %v1378
      %v1467 = vmul.f32 %v1251, %v1380
      %v1468 = vmul.f32 %v1253, %v1382
      %v1469 = vmul.f32 %v1255, %v1384
      %v1470 = vmul.f32 %v1257, %v1386
      %v1471 = vmul.f32 %v1259, %v1388
      %v1472 = vmul.f32 %v1261, %v1390
      %v1473 = vmul.f32 %v1263, %v1392
      %v1474 = vmul.f32 %v1265, %v1394
      %v1475 = vmul.f32 %v1267, %v1396
      %v1476 = vmul.f32 %v1269, %v1398
      %v1477 = vmul.f32 %v1271, %v1400
      %v1478 = vmul.f32 %v1273, %v1402
      %v1479 = vmul.f32 %v1275, %v1404
      %v1480 = vmul.f32 %v1277, %v1406
      %v1481 = vmul.f32 %v1279, %v1408
      %v1482 = vmul.f32 %v1281, %v1410
      %v1483 = vmul.f32 %v1283, %v1412
      %v1484 = vmul.f32 %v1285, %v1414
      %v1485 = vmul.f32 %v1287, %v1416
      %v1486 = vmul.f32 %v1289, %v1418
      %v1487 = vmul.f32 %v1291, %v1420
      %v1488 = vmul.f32 %v1293, %v1422
      %v1489 = vmul.f32 %v1295, %v1424
      %v1490 = vmul.f32 %v1297, %v1426
      %1523 = vrot.lane.b32.xlu0 %v1459, 127
      %v1524 = vpop.permute.xlu0 %1523
      %1525 = vrot.lane.b32.xlu0 %v1460, 127
      %v1526 = vpop.permute.xlu0 %1525
      %1527 = vrot.lane.b32.xlu0 %v1461, 127
      %v1528 = vpop.permute.xlu0 %1527
      %1529 = vrot.lane.b32.xlu0 %v1462, 127
      %v1530 = vpop.permute.xlu0 %1529
      %1531 = vrot.lane.b32.xlu0 %v1463, 127
      %v1532 = vpop.permute.xlu0 %1531
      %1533 = vrot.lane.b32.xlu0 %v1464, 127
      %v1534 = vpop.permute.xlu0 %1533
      %1535 = vrot.lane.b32.xlu0 %v1465, 127
      %v1536 = vpop.permute.xlu0 %1535
      %1537 = vrot.lane.b32.xlu0 %v1466, 127
      %v1538 = vpop.permute.xlu0 %1537
      %1539 = vrot.lane.b32.xlu0 %v1467, 127
      %v1540 = vpop.permute.xlu0 %1539
      %1541 = vrot.lane.b32.xlu0 %v1468, 127
      %v1542 = vpop.permute.xlu0 %1541
      %1543 = vrot.lane.b32.xlu0 %v1469, 127
      %v1544 = vpop.permute.xlu0 %1543
      %1545 = vrot.lane.b32.xlu0 %v1470, 127
      %v1546 = vpop.permute.xlu0 %1545
      %1547 = vrot.lane.b32.xlu0 %v1471, 127
      %v1548 = vpop.permute.xlu0 %1547
      %1549 = vrot.lane.b32.xlu0 %v1472, 127
      %v1550 = vpop.permute.xlu0 %1549
      %1551 = vrot.lane.b32.xlu0 %v1473, 127
      %v1552 = vpop.permute.xlu0 %1551
      %1553 = vrot.lane.b32.xlu0 %v1474, 127
      %v1554 = vpop.permute.xlu0 %1553
      %1555 = vrot.lane.b32.xlu0 %v1475, 127
      %v1556 = vpop.permute.xlu0 %1555
      %1557 = vrot.lane.b32.xlu0 %v1476, 127
      %v1558 = vpop.permute.xlu0 %1557
      %1559 = vrot.lane.b32.xlu0 %v1477, 127
      %v1560 = vpop.permute.xlu0 %1559
      %1561 = vrot.lane.b32.xlu0 %v1478, 127
      %v1562 = vpop.permute.xlu0 %1561
      %1563 = vrot.lane.b32.xlu0 %v1479, 127
      %v1564 = vpop.permute.xlu0 %1563
      %1565 = vrot.lane.b32.xlu0 %v1480, 127
      %v1566 = vpop.permute.xlu0 %1565
      %1567 = vrot.lane.b32.xlu0 %v1481, 127
      %v1568 = vpop.permute.xlu0 %1567
      %1569 = vrot.lane.b32.xlu0 %v1482, 127
      %v1570 = vpop.permute.xlu0 %1569
      %1571 = vrot.lane.b32.xlu0 %v1483, 127
      %v1572 = vpop.permute.xlu0 %1571
      %1573 = vrot.lane.b32.xlu0 %v1484, 127
      %v1574 = vpop.permute.xlu0 %1573
      %1575 = vrot.lane.b32.xlu0 %v1485, 127
      %v1576 = vpop.permute.xlu0 %1575
      %1577 = vrot.lane.b32.xlu0 %v1486, 127
      %v1578 = vpop.permute.xlu0 %1577
      %1579 = vrot.lane.b32.xlu0 %v1487, 127
      %v1580 = vpop.permute.xlu0 %1579
      %1581 = vrot.lane.b32.xlu0 %v1488, 127
      %v1582 = vpop.permute.xlu0 %1581
      %1583 = vrot.lane.b32.xlu0 %v1489, 127
      %v1584 = vpop.permute.xlu0 %1583
      %1585 = vrot.lane.b32.xlu0 %v1490, 127
      %v1586 = vpop.permute.xlu0 %1585
      %v1619 = vadd.f32 %v1108, %v1524
      %v1620 = vadd.f32 %v1111, %v1526
      %v1621 = vadd.f32 %v1116, %v1528
      %v1622 = vadd.f32 %v1119, %v1530
      %v1623 = vadd.f32 %v1124, %v1532
      %v1624 = vadd.f32 %v1127, %v1534
      %v1625 = vadd.f32 %v1132, %v1536
      %v1626 = vadd.f32 %v1135, %v1538
      %v1627 = vadd.f32 %v1140, %v1540
      %v1628 = vadd.f32 %v1143, %v1542
      %v1629 = vadd.f32 %v1148, %v1544
      %v1630 = vadd.f32 %v1151, %v1546
      %v1631 = vadd.f32 %v1156, %v1548
      %v1632 = vadd.f32 %v1159, %v1550
      %v1633 = vadd.f32 %v1164, %v1552
      %v1634 = vadd.f32 %v1167, %v1554
      %v1635 = vadd.f32 %v1172, %v1556
      %v1636 = vadd.f32 %v1175, %v1558
      %v1637 = vadd.f32 %v1180, %v1560
      %v1638 = vadd.f32 %v1183, %v1562
      %v1639 = vadd.f32 %v1188, %v1564
      %v1640 = vadd.f32 %v1191, %v1566
      %v1641 = vadd.f32 %v1196, %v1568
      %v1642 = vadd.f32 %v1199, %v1570
      %v1643 = vadd.f32 %v1204, %v1572
      %v1644 = vadd.f32 %v1207, %v1574
      %v1645 = vadd.f32 %v1212, %v1576
      %v1646 = vadd.f32 %v1215, %v1578
      %v1647 = vadd.f32 %v1220, %v1580
      %v1648 = vadd.f32 %v1223, %v1582
      %v1649 = vadd.f32 %v1228, %v1584
      %v1650 = vadd.f32 %v1231, %v1586
      %v1651 = vstv %s1298
      %v1652 = vmul.f32 %v1619, %v1651
      %v1653 = vmul.f32 %v1620, %v1651
      %v1654 = vmul.f32 %v1621, %v1651
      %v1655 = vmul.f32 %v1622, %v1651
      %v1656 = vmul.f32 %v1623, %v1651
      %v1657 = vmul.f32 %v1624, %v1651
      %v1658 = vmul.f32 %v1625, %v1651
      %v1659 = vmul.f32 %v1626, %v1651
      %v1660 = vmul.f32 %v1627, %v1651
      %v1661 = vmul.f32 %v1628, %v1651
      %v1662 = vmul.f32 %v1629, %v1651
      %v1663 = vmul.f32 %v1630, %v1651
      %v1664 = vmul.f32 %v1631, %v1651
      %v1665 = vmul.f32 %v1632, %v1651
      %v1666 = vmul.f32 %v1633, %v1651
      %v1667 = vmul.f32 %v1634, %v1651
      %v1668 = vmul.f32 %v1635, %v1651
      %v1669 = vmul.f32 %v1636, %v1651
      %v1670 = vmul.f32 %v1637, %v1651
      %v1671 = vmul.f32 %v1638, %v1651
      %v1672 = vmul.f32 %v1639, %v1651
      %v1673 = vmul.f32 %v1640, %v1651
      %v1674 = vmul.f32 %v1641, %v1651
      %v1675 = vmul.f32 %v1642, %v1651
      %v1676 = vmul.f32 %v1643, %v1651
      %v1677 = vmul.f32 %v1644, %v1651
      %v1678 = vmul.f32 %v1645, %v1651
      %v1679 = vmul.f32 %v1646, %v1651
      %v1680 = vmul.f32 %v1647, %v1651
      %v1681 = vmul.f32 %v1648, %v1651
      %v1682 = vmul.f32 %v1649, %v1651
      %v1683 = vmul.f32 %v1650, %v1651
      %vm1684 = vcmask 7168
      %1685 = vst.msk [vmem:[%s357] sm:$0xff] %vm1684, %v1652
      %1686 = vst.msk [vmem:[%s357 + $0x8] sm:$0xff] %vm1684, %v1653
      %1687 = vst.msk [vmem:[%s357 + $0x10] sm:$0xff] %vm1684, %v1654
      %1688 = vst.msk [vmem:[%s357 + $0x18] sm:$0xff] %vm1684, %v1655
      %1689 = vst.msk [vmem:[%s357 + $0x20] sm:$0xff] %vm1684, %v1656
      %1690 = vst.msk [vmem:[%s357 + $0x28] sm:$0xff] %vm1684, %v1657
      %1691 = vst.msk [vmem:[%s357 + $0x30] sm:$0xff] %vm1684, %v1658
      %1692 = vst.msk [vmem:[%s357 + $0x38] sm:$0xff] %vm1684, %v1659
      %1693 = vst.msk [vmem:[%s357 + $0x40] sm:$0xff] %vm1684, %v1660
      %1694 = vst.msk [vmem:[%s357 + $0x48] sm:$0xff] %vm1684, %v1661
      %1695 = vst.msk [vmem:[%s357 + $0x50] sm:$0xff] %vm1684, %v1662
      %1696 = vst.msk [vmem:[%s357 + $0x58] sm:$0xff] %vm1684, %v1663
      %1697 = vst.msk [vmem:[%s357 + $0x60] sm:$0xff] %vm1684, %v1664
      %1698 = vst.msk [vmem:[%s357 + $0x68] sm:$0xff] %vm1684, %v1665
      %1699 = vst.msk [vmem:[%s357 + $0x70] sm:$0xff] %vm1684, %v1666
      %1700 = vst.msk [vmem:[%s357 + $0x78] sm:$0xff] %vm1684, %v1667
      %1701 = vst.msk [vmem:[%s357 + $0x80] sm:$0xff] %vm1684, %v1668
      %1702 = vst.msk [vmem:[%s357 + $0x88] sm:$0xff] %vm1684, %v1669
      %1703 = vst.msk [vmem:[%s357 + $0x90] sm:$0xff] %vm1684, %v1670
      %1704 = vst.msk [vmem:[%s357 + $0x98] sm:$0xff] %vm1684, %v1671
      %1705 = vst.msk [vmem:[%s357 + $0xa0] sm:$0xff] %vm1684, %v1672
      %1706 = vst.msk [vmem:[%s357 + $0xa8] sm:$0xff] %vm1684, %v1673
      %1707 = vst.msk [vmem:[%s357 + $0xb0] sm:$0xff] %vm1684, %v1674
      %1708 = vst.msk [vmem:[%s357 + $0xb8] sm:$0xff] %vm1684, %v1675
      %1709 = vst.msk [vmem:[%s357 + $0xc0] sm:$0xff] %vm1684, %v1676
      %1710 = vst.msk [vmem:[%s357 + $0xc8] sm:$0xff] %vm1684, %v1677
      %1711 = vst.msk [vmem:[%s357 + $0xd0] sm:$0xff] %vm1684, %v1678
      %1712 = vst.msk [vmem:[%s357 + $0xd8] sm:$0xff] %vm1684, %v1679
      %1713 = vst.msk [vmem:[%s357 + $0xe0] sm:$0xff] %vm1684, %v1680
      %1714 = vst.msk [vmem:[%s357 + $0xe8] sm:$0xff] %vm1684, %v1681
      %1715 = vst.msk [vmem:[%s357 + $0xf0] sm:$0xff] %vm1684, %v1682
      %1716 = vst.msk [vmem:[%s357 + $0xf8] sm:$0xff] %vm1684, %v1683
      %s1717 = smul.u32 32, %s21
      %p1718 = scmp.lt.s32.totalorder %s1717, 63
      %s1719 = scalar_select %p1718, %s1717, 63
      %s1720 = smul.addr %s1719, 8
      %s1721 = scalar_lea.vmem %s9, %s1720
      // Predicated region
      $region57: #{tpu_custom_call.1} parent=55 // pred_check
        %p1722 = pneg %p238
      $region58: #{tpu_custom_call.1} parent=55 // pred_check_branch
        %1724 = sbr.rel (%p1722) target = $region60
      $region59: #{tpu_custom_call.1} parent=55 // pred_region
        %s1725 = smul.u32 32, %s21
      $region60: #{tpu_custom_call.1} parent=55 // pred_fallthru
        _
    $region56: #{tpu_custom_call.1} parent=5 // pred_fallthru
      _
    %p1726 = scmp.le.s32.totalorder 2, %s16
    // Predicated region
    $region61: #{tpu_custom_call.1} parent=5 // pred_check
      %p1727 = pneg %p1726
    $region62: #{tpu_custom_call.1} parent=5 // pred_check_branch
      %1729 = sbr.rel (%p1727) target = $region64
    $region63: #{tpu_custom_call.1} parent=5 // pred_region
      %s1730 = ssub.s32 %s16, 2
      // Predicated region
      $region65: #{tpu_custom_call.1} parent=63 // pred_check
        %p1731 = pneg %p244
      $region66: #{tpu_custom_call.1} parent=63 // pred_check_branch
        %1733 = sbr.rel (%p1731) target = $region68
      $region67: #{tpu_custom_call.1} parent=63 // pred_region
        %s1734 = smul.u32 32, %s22
        %p1735 = scmp.lt.s32.totalorder %s1734, 63
        %s1736 = scalar_select %p1735, %s1734, 63
        %s1737 = smul.addr %s1736, 8
        %s1738 = scalar_lea.vmem %s9, %s1737
      $region68: #{tpu_custom_call.1} parent=63 // pred_fallthru
        _
    $region64: #{tpu_custom_call.1} parent=5 // pred_fallthru
      _
  $region6: #{tpu_custom_call.1} parent=0 // loop_footer
    %s20 = sadd.s32 1, %s16
  $region7: #{tpu_custom_call.1} parent=0 // loop_footer_branch
    %15 = sbr.rel target = $region3
  $region8: #{tpu_custom_call.1} parent=0 // loop_exit
    _

</llo_original>
